<compile_context>
chip_gen: v6e
topology: v6e:2x2x1
jax: 0.10.0
libtpu: 0.0.40
codegen_flags: <defaults>
</compile_context>

<pallas_src>
import jax
import jax.numpy as jnp
from jax.experimental import pallas as pl
from jax.experimental.pallas import tpu as pltpu


def _silu(x):
    return x * jax.nn.sigmoid(x)


def _edge_mlp_kernel(
    x_ref,            # (TE, Din)  concatenated [h_row, h_col, edge_attr]  (compute dtype)
    w1_ref, b1_ref,   # (Din, 2H) compute dtype, (1, 2H) f32
    w2_ref, b2_ref,   # (2H,  H)  compute dtype, (1,  H) f32
    w3_ref, b3_ref,   # (H,   H)  compute dtype, (1,  H) f32
    feat_out_ref,     # (TE, H)
):
    cdt = x_ref.dtype
    x = x_ref[...]

    h = jnp.dot(x, w1_ref[...], preferred_element_type=jnp.float32) + b1_ref[...]
    h = _silu(h)                                  # f32 math on VPU/EUP
    h = jnp.dot(h.astype(cdt), w2_ref[...],
                preferred_element_type=jnp.float32) + b2_ref[...]
    h = _silu(h)
    h = jnp.dot(h.astype(cdt), w3_ref[...],
                preferred_element_type=jnp.float32) + b3_ref[...]

    feat_out_ref[...] = h.astype(feat_out_ref.dtype)


def edge_embedding_forward(
    node_features,  # [N, node_dim]
    node_coords,    # [N, 3]
    edge_index,     # [2, E] int32
    edge_attr,      # [E, edge_dim] or None
    params,         # dict of MLP params (f32)
    *,
    tile_e=512,
    compute_dtype=jnp.bfloat16,
    out_dtype=jnp.float32,
):
    row, col = edge_index[0], edge_index[1]

    # --- glue (gather + concat) in plain JAX ---
    feats = [jnp.take(node_features, row, axis=0),
             jnp.take(node_features, col, axis=0)]
    if edge_attr is not None:
        feats.append(edge_attr)
    x = jnp.concatenate(feats, axis=-1).astype(compute_dtype)   # [E, Din]

    # Equivariant part: pure element-wise, 3-wide lanes -> keep out of the kernel.
    edge_coords = (jnp.take(node_coords, row, axis=0)
                   - jnp.take(node_coords, col, axis=0))        # [E, 3]

    E, din = x.shape
    two_h = params["w1"].shape[1]
    hidden = params["w3"].shape[1]

    # Pad the edge dimension up to a multiple of the tile size.
    e_pad = pl.cdiv(E, tile_e) * tile_e
    if e_pad != E:
        x = jnp.pad(x, ((0, e_pad - E), (0, 0)))

    w1 = params["w1"].astype(compute_dtype)
    w2 = params["w2"].astype(compute_dtype)
    w3 = params["w3"].astype(compute_dtype)
    b1 = params["b1"].reshape(1, -1).astype(jnp.float32)
    b2 = params["b2"].reshape(1, -1).astype(jnp.float32)
    b3 = params["b3"].reshape(1, -1).astype(jnp.float32)

    grid = (e_pad // tile_e,)

    # Edge-tiled input/output; weights/biases have constant index_maps and stay
    # resident in VMEM across all grid steps.
    in_specs = [
        pl.BlockSpec((tile_e, din), lambda i: (i, 0)),
        pl.BlockSpec((din, two_h), lambda i: (0, 0)),
        pl.BlockSpec((1, two_h), lambda i: (0, 0)),
        pl.BlockSpec((two_h, hidden), lambda i: (0, 0)),
        pl.BlockSpec((1, hidden), lambda i: (0, 0)),
        pl.BlockSpec((hidden, hidden), lambda i: (0, 0)),
        pl.BlockSpec((1, hidden), lambda i: (0, 0)),
    ]
    out_specs = pl.BlockSpec((tile_e, hidden), lambda i: (i, 0))
    out_shape = jax.ShapeDtypeStruct((e_pad, hidden), out_dtype)

    edge_features = pl.pallas_call(
        _edge_mlp_kernel,
        grid=grid,
        in_specs=in_specs,
        out_specs=out_specs,
        out_shape=out_shape,
        compiler_params=pltpu.CompilerParams(
            dimension_semantics=("parallel",)),
    )(x, w1, b1, w2, b2, w3, b3)

    if e_pad != E:
        edge_features = edge_features[:E]

    return edge_features, edge_coords


def init_params(key, node_dim, edge_dim, hidden_dim):
    input_dim = node_dim * 2 + (edge_dim if edge_dim > 0 else 0)
    k1, k2, k3 = jax.random.split(key, 3)
    scale = 0.1
    return {
        "w1": scale * jax.random.normal(k1, (input_dim, hidden_dim * 2), jnp.float32),
        "b1": jnp.zeros((hidden_dim * 2,), jnp.float32),
        "w2": scale * jax.random.normal(k2, (hidden_dim * 2, hidden_dim), jnp.float32),
        "b2": jnp.zeros((hidden_dim,), jnp.float32),
        "w3": scale * jax.random.normal(k3, (hidden_dim, hidden_dim), jnp.float32),
        "b3": jnp.zeros((hidden_dim,), jnp.float32),
    }


def _reference_f32(node_features, node_coords, edge_index, edge_attr, params):
    """Pure-f32 JAX reference mirroring the PyTorch forward."""
    row, col = edge_index[0], edge_index[1]
    x = jnp.concatenate(
        [node_features[row], node_features[col], edge_attr], axis=-1)
    h = _silu(x @ params["w1"] + params["b1"])
    h = _silu(h @ params["w2"] + params["b2"])
    h = h @ params["w3"] + params["b3"]
    coords = node_coords[row] - node_coords[col]
    return h, coords


def _reference_emulated(node_features, edge_index, edge_attr, params, compute_dtype):
    """Reference that emulates the kernel numerics (bf16 operands, f32 accum/SiLU)."""
    row, col = edge_index[0], edge_index[1]
    x = jnp.concatenate(
        [node_features[row], node_features[col], edge_attr], axis=-1)

    def lin(a, w, b):
        return jnp.dot(a.astype(compute_dtype), w.astype(compute_dtype),
                       preferred_element_type=jnp.float32) + b

    h = _silu(lin(x, params["w1"], params["b1"]))
    h = _silu(lin(h, params["w2"], params["b2"]))
    h = lin(h, params["w3"], params["b3"])
    return h


if __name__ == "__main__":
    node_dim, edge_dim, hidden_dim = 8, 4, 128
    N, E = 64, 1000   # E is deliberately NOT a multiple of tile_e (tests padding)

    key = jax.random.PRNGKey(0)
    k_nf, k_nc, k_ei, k_ea, k_p = jax.random.split(key, 5)

    node_features = jax.random.normal(k_nf, (N, node_dim), jnp.float32)
    node_coords = jax.random.normal(k_nc, (N, 3), jnp.float32)
    edge_index = jax.random.randint(k_ei, (2, E), 0, N, dtype=jnp.int32)
    edge_attr = jax.random.normal(k_ea, (E, edge_dim), jnp.float32)
    params = init_params(k_p, node_dim, edge_dim, hidden_dim)

    feat, coords = edge_embedding_forward(
        node_features, node_coords, edge_index, edge_attr, params,
        tile_e=512, compute_dtype=jnp.bfloat16)
    jax.block_until_ready((feat, coords))

    feat_f32, coords_ref = _reference_f32(
        node_features, node_coords, edge_index, edge_attr, params)
    feat_em = _reference_emulated(
        node_features, edge_index, edge_attr, params, jnp.bfloat16)

    assert feat.shape == (E, hidden_dim) and coords.shape == (E, 3)
    # Coordinates are exact (plain JAX subtraction).
    assert jnp.allclose(coords, coords_ref, atol=1e-6, rtol=1e-6)
    # Tight check vs a reference using identical bf16/f32-accum numerics.
    assert jnp.allclose(feat, feat_em, atol=1e-4, rtol=1e-4)
    # Loose sanity check vs the pure-f32 PyTorch-equivalent math.
    assert jnp.allclose(feat, feat_f32, atol=5e-2, rtol=5e-2)

    print("KERNEL_OK")
</pallas_src>

<mosaic_0001>
module attributes {stable_mosaic.version = 11 : i64} {
  func.func @_edge_mlp_kernel(%arg0: i32, %arg1: memref<512x20xbf16, #tpu.memory_space<vmem>>, %arg2: memref<20x256xbf16, #tpu.memory_space<vmem>>, %arg3: memref<1x256xf32, #tpu.memory_space<vmem>>, %arg4: memref<256x128xbf16, #tpu.memory_space<vmem>>, %arg5: memref<1x128xf32, #tpu.memory_space<vmem>>, %arg6: memref<128x128xbf16, #tpu.memory_space<vmem>>, %arg7: memref<1x128xf32, #tpu.memory_space<vmem>>, %arg8: memref<512x128xf32, #tpu.memory_space<vmem>>) attributes {dimension_semantics = [#tpu.dimension_semantics<parallel>], iteration_bounds = array<i64: 2>, scalar_prefetch = 0 : i64, scratch_operands = 0 : i64, tpu.core_type = #tpu.core_type<tc>, window_params = [{transform_indices = @transform_0, window_bounds = array<i64: 512, 20>}, {pipeline_mode = #tpu.pipeline_mode<synchronous>, transform_indices = @transform_1, window_bounds = array<i64: 20, 256>}, {pipeline_mode = #tpu.pipeline_mode<synchronous>, transform_indices = @transform_2, window_bounds = array<i64: 1, 256>}, {pipeline_mode = #tpu.pipeline_mode<synchronous>, transform_indices = @transform_3, window_bounds = array<i64: 256, 128>}, {pipeline_mode = #tpu.pipeline_mode<synchronous>, transform_indices = @transform_4, window_bounds = array<i64: 1, 128>}, {pipeline_mode = #tpu.pipeline_mode<synchronous>, transform_indices = @transform_5, window_bounds = array<i64: 128, 128>}, {pipeline_mode = #tpu.pipeline_mode<synchronous>, transform_indices = @transform_6, window_bounds = array<i64: 1, 128>}, {transform_indices = @transform_7, window_bounds = array<i64: 512, 128>}]} {
    %c0 = arith.constant 0 : index
    %c0_0 = arith.constant 0 : index
    %0 = vector.load %arg1[%c0, %c0_0] : memref<512x20xbf16, #tpu.memory_space<vmem>>, vector<512x20xbf16>
    %c0_1 = arith.constant 0 : index
    %c0_2 = arith.constant 0 : index
    %1 = vector.load %arg2[%c0_1, %c0_2] : memref<20x256xbf16, #tpu.memory_space<vmem>>, vector<20x256xbf16>
    %cst = arith.constant dense<0.000000e+00> : vector<512x256xf32>
    %2 = tpu.matmul %0, %1, %cst {dimension_numbers = #tpu.dot_dimension_numbers<[1], [0], [0], [1], [0, 0, 1, 1], [], []>} : vector<512x20xbf16>, vector<20x256xbf16>, vector<512x256xf32> -> vector<512x256xf32>
    %c0_3 = arith.constant 0 : index
    %c0_4 = arith.constant 0 : index
    %3 = vector.load %arg3[%c0_3, %c0_4] : memref<1x256xf32, #tpu.memory_space<vmem>>, vector<1x256xf32>
    %4 = vector.broadcast %3 : vector<1x256xf32> to vector<512x256xf32>
    %5 = arith.addf %2, %4 : vector<512x256xf32>
    %6 = arith.negf %5 : vector<512x256xf32>
    %7 = math.exp %6 : vector<512x256xf32>
    %cst_5 = arith.constant 1.000000e+00 : f32
    %8 = vector.broadcast %cst_5 : f32 to vector<512x256xf32>
    %9 = arith.addf %8, %7 : vector<512x256xf32>
    %10 = arith.divf %8, %9 : vector<512x256xf32>
    %11 = arith.mulf %5, %10 : vector<512x256xf32>
    %12 = arith.truncf %11 : vector<512x256xf32> to vector<512x256xbf16>
    %c0_6 = arith.constant 0 : index
    %c0_7 = arith.constant 0 : index
    %13 = vector.load %arg4[%c0_6, %c0_7] : memref<256x128xbf16, #tpu.memory_space<vmem>>, vector<256x128xbf16>
    %cst_8 = arith.constant dense<0.000000e+00> : vector<512x128xf32>
    %14 = tpu.matmul %12, %13, %cst_8 {dimension_numbers = #tpu.dot_dimension_numbers<[1], [0], [0], [1], [0, 0, 1, 1], [], []>} : vector<512x256xbf16>, vector<256x128xbf16>, vector<512x128xf32> -> vector<512x128xf32>
    %c0_9 = arith.constant 0 : index
    %c0_10 = arith.constant 0 : index
    %15 = vector.load %arg5[%c0_9, %c0_10] : memref<1x128xf32, #tpu.memory_space<vmem>>, vector<1x128xf32>
    %16 = vector.broadcast %15 : vector<1x128xf32> to vector<512x128xf32>
    %17 = arith.addf %14, %16 : vector<512x128xf32>
    %18 = arith.negf %17 : vector<512x128xf32>
    %19 = math.exp %18 : vector<512x128xf32>
    %cst_11 = arith.constant 1.000000e+00 : f32
    %20 = vector.broadcast %cst_11 : f32 to vector<512x128xf32>
    %21 = arith.addf %20, %19 : vector<512x128xf32>
    %22 = arith.divf %20, %21 : vector<512x128xf32>
    %23 = arith.mulf %17, %22 : vector<512x128xf32>
    %24 = arith.truncf %23 : vector<512x128xf32> to vector<512x128xbf16>
    %c0_12 = arith.constant 0 : index
    %c0_13 = arith.constant 0 : index
    %25 = vector.load %arg6[%c0_12, %c0_13] : memref<128x128xbf16, #tpu.memory_space<vmem>>, vector<128x128xbf16>
    %cst_14 = arith.constant dense<0.000000e+00> : vector<512x128xf32>
    %26 = tpu.matmul %24, %25, %cst_14 {dimension_numbers = #tpu.dot_dimension_numbers<[1], [0], [0], [1], [0, 0, 1, 1], [], []>} : vector<512x128xbf16>, vector<128x128xbf16>, vector<512x128xf32> -> vector<512x128xf32>
    %c0_15 = arith.constant 0 : index
    %c0_16 = arith.constant 0 : index
    %27 = vector.load %arg7[%c0_15, %c0_16] : memref<1x128xf32, #tpu.memory_space<vmem>>, vector<1x128xf32>
    %28 = vector.broadcast %27 : vector<1x128xf32> to vector<512x128xf32>
    %29 = arith.addf %26, %28 : vector<512x128xf32>
    %c0_17 = arith.constant 0 : index
    %c0_18 = arith.constant 0 : index
    %30 = vector.load %arg8[%c0_17, %c0_18] : memref<512x128xf32, #tpu.memory_space<vmem>>, vector<512x128xf32>
    tpu.vector_store %arg8[%c0_17, %c0_18], %29 {strides = array<i32>} : memref<512x128xf32, #tpu.memory_space<vmem>>, vector<512x128xf32>,
    return
  }
  func.func @transform_0(%arg0: i32) -> (i32, i32) {
    %c0_i32 = arith.constant 0 : i32
    %c0_i32_0 = arith.constant 0 : i32
    return %arg0, %c0_i32 : i32, i32
  }
  func.func @transform_1(%arg0: i32) -> (i32, i32) {
    %c0_i32 = arith.constant 0 : i32
    %c0_i32_0 = arith.constant 0 : i32
    %c0_i32_1 = arith.constant 0 : i32
    return %c0_i32, %c0_i32_0 : i32, i32
  }
  func.func @transform_2(%arg0: i32) -> (i32, i32) {
    %c0_i32 = arith.constant 0 : i32
    %c0_i32_0 = arith.constant 0 : i32
    %c0_i32_1 = arith.constant 0 : i32
    return %c0_i32, %c0_i32_0 : i32, i32
  }
  func.func @transform_3(%arg0: i32) -> (i32, i32) {
    %c0_i32 = arith.constant 0 : i32
    %c0_i32_0 = arith.constant 0 : i32
    %c0_i32_1 = arith.constant 0 : i32
    return %c0_i32, %c0_i32_0 : i32, i32
  }
  func.func @transform_4(%arg0: i32) -> (i32, i32) {
    %c0_i32 = arith.constant 0 : i32
    %c0_i32_0 = arith.constant 0 : i32
    %c0_i32_1 = arith.constant 0 : i32
    return %c0_i32, %c0_i32_0 : i32, i32
  }
  func.func @transform_5(%arg0: i32) -> (i32, i32) {
    %c0_i32 = arith.constant 0 : i32
    %c0_i32_0 = arith.constant 0 : i32
    %c0_i32_1 = arith.constant 0 : i32
    return %c0_i32, %c0_i32_0 : i32, i32
  }
  func.func @transform_6(%arg0: i32) -> (i32, i32) {
    %c0_i32 = arith.constant 0 : i32
    %c0_i32_0 = arith.constant 0 : i32
    %c0_i32_1 = arith.constant 0 : i32
    return %c0_i32, %c0_i32_0 : i32, i32
  }
  func.func @transform_7(%arg0: i32) -> (i32, i32) {
    %c0_i32 = arith.constant 0 : i32
    %c0_i32_0 = arith.constant 0 : i32
    return %arg0, %c0_i32 : i32, i32
  }
}

</mosaic_0001>

<llo_original>
// kernel: tpu_custom_call.1
$region0: #{tpu_custom_call.1}
  #allocation0 [shape = 'u32[]', space=smem, size = 0x4, offset = 0x4, fixed_abs, tag = 'smem constant byte address 0x4 - core index']
  #allocation1 [shape = 'u32[144,128]{1,0:T(1,128)}', space=vmem, size = 0x12000, scoped, tag = 'internal scratch']
  %s0 = inlined_call_operand.vmem [shape: bf16[1024,20], index: 0, kind: input, shape index: {}]
  %s1 = inlined_call_operand.vmem [shape: bf16[20,256], index: 1, kind: input, shape index: {}]
  %s2 = inlined_call_operand.vmem [shape: f32[1,256], index: 2, kind: input, shape index: {}]
  %s3 = inlined_call_operand.vmem [shape: bf16[256,128], index: 3, kind: input, shape index: {}]
  %s4 = inlined_call_operand.vmem [shape: f32[1,128], index: 4, kind: input, shape index: {}]
  %s5 = inlined_call_operand.vmem [shape: bf16[128,128], index: 5, kind: input, shape index: {}]
  %s6 = inlined_call_operand.vmem [shape: f32[1,128], index: 6, kind: input, shape index: {}]
  %s7 = inlined_call_operand.hbm [shape: f32[1024,128], index: 7, kind: output, shape index: {}]
  %s8 = sld [smem:[#allocation0]]
  $region61: #{tpu_custom_call.1} parent=0
    _
  %s10 = ssub.s32 1, %s8
  %s11 = scalar_select 0, %s10, %s8
  $region1: #{tpu_custom_call.1} parent=0
    #allocation2 [shape = 'u8[524288]{0}', space=vmem, size = 0x80000, scoped, tag = 'output window, operand 0']
    #allocation3 [shape = 's32[2]{0}', space=sflag, size = 0x8, scoped, tag = 'scoped memory for tpu_custom_call.1']
    %12 = vsyncpa [#allocation3], 0
    %s13 = scalar_lea.sflag [#allocation3], 1
    %14 = vsyncpa %s13, 0
    loop: start=0, step=1, limit=4
    $region2: #{tpu_custom_call.1} parent=1 // loop_pre_header
      _
    $region3: #{tpu_custom_call.1} parent=1 // loop_header
      %s16 = sphi 0, %s20
      %p17 = scmp.ge.s32.totalorder %s16, 4
      %s26 = sphi 0, %s28
      %s29 = sphi 0, %s26
      %s30 = sphi 0, %s29
      %s46 = sphi 0, %s30
      %s50 = sphi 0, %s50
      %s52 = sphi 0, %s50
      %s53 = sphi 0, %s52
      %s67 = sphi 0, %s53
      %s71 = sphi 0, %s71
      %s73 = sphi 0, %s71
      %s74 = sphi 0, %s73
      %s88 = sphi 0, %s74
      %s92 = sphi 0, %s92
      %s94 = sphi 0, %s92
      %s95 = sphi 0, %s94
      %s109 = sphi 0, %s95
      %s113 = sphi 0, %s113
      %s115 = sphi 0, %s113
      %s116 = sphi 0, %s115
      %s130 = sphi 0, %s116
      %s134 = sphi 0, %s134
      %s136 = sphi 0, %s134
      %s137 = sphi 0, %s136
      %s151 = sphi 0, %s137
      %s155 = sphi 0, %s155
      %s157 = sphi 0, %s155
      %s158 = sphi 0, %s157
      %s172 = sphi 0, %s158
      %s178 = sphi 0, %s180
      %s181 = sphi 0, %s178
      %s182 = sphi 0, %s181
      %s198 = sphi 0, %s182
    $region4: #{tpu_custom_call.1} parent=1 // loop_header_branch
      %19 = sbr.rel (%p17) target = $region8
    $region5: #{tpu_custom_call.1} parent=1 // loop_body
      %s21 = ssub.s32 %s16, 1
      %s22 = ssub.s32 %s16, 2
      %s23 = sadd.s32 %s16, 1
      %s24 = ssub.s32 %s16, %s23
      %p25 = scmp.eq.s32.totalorder %s24, 0
      %s27 = sadd.s32 %s26, 1
      %s28 = scalar_select %p25, %s26, %s27
      %p31 = pneg %p25
      %p32 = scmp.eq.s32.totalorder %s16, 1
      %p33 = por %p31, %p32
      %p34 = scmp.ne.s32.totalorder %s26, %s29
      %p35 = scmp.eq.s32.totalorder %s16, 0
      %p36 = por %p34, %p35
      %p37 = scmp.ne.s32.totalorder %s26, %s29
      %p38 = scmp.eq.s32.totalorder %s21, 1
      %p39 = por %p37, %p38
      %p40 = scmp.ne.s32.totalorder %s29, %s30
      %p41 = scmp.eq.s32.totalorder %s21, 0
      %p42 = por %p40, %p41
      %p43 = scmp.ne.s32.totalorder %s29, %s30
      %p44 = scmp.eq.s32.totalorder %s22, 1
      %p45 = por %p43, %p44
      %p47 = scmp.ne.s32.totalorder %s30, %s46
      %p48 = scmp.eq.s32.totalorder %s22, 0
      %p49 = por %p47, %p48
      %s51 = sadd.s32 %s50, 1
      %p54 = scmp.eq.s32.totalorder %s16, 1
      %p55 = scmp.ne.s32.totalorder %s50, %s52
      %p56 = scmp.eq.s32.totalorder %s16, 0
      %p57 = por %p55, %p56
      %p58 = scmp.ne.s32.totalorder %s50, %s52
      %p59 = scmp.eq.s32.totalorder %s21, 1
      %p60 = por %p58, %p59
      %p61 = scmp.ne.s32.totalorder %s52, %s53
      %p62 = scmp.eq.s32.totalorder %s21, 0
      %p63 = por %p61, %p62
      %p64 = scmp.ne.s32.totalorder %s52, %s53
      %p65 = scmp.eq.s32.totalorder %s22, 1
      %p66 = por %p64, %p65
      %p68 = scmp.ne.s32.totalorder %s53, %s67
      %p69 = scmp.eq.s32.totalorder %s22, 0
      %p70 = por %p68, %p69
      %s72 = sadd.s32 %s71, 1
      %p75 = scmp.eq.s32.totalorder %s16, 1
      %p76 = scmp.ne.s32.totalorder %s71, %s73
      %p77 = scmp.eq.s32.totalorder %s16, 0
      %p78 = por %p76, %p77
      %p79 = scmp.ne.s32.totalorder %s71, %s73
      %p80 = scmp.eq.s32.totalorder %s21, 1
      %p81 = por %p79, %p80
      %p82 = scmp.ne.s32.totalorder %s73, %s74
      %p83 = scmp.eq.s32.totalorder %s21, 0
      %p84 = por %p82, %p83
      %p85 = scmp.ne.s32.totalorder %s73, %s74
      %p86 = scmp.eq.s32.totalorder %s22, 1
      %p87 = por %p85, %p86
      %p89 = scmp.ne.s32.totalorder %s74, %s88
      %p90 = scmp.eq.s32.totalorder %s22, 0
      %p91 = por %p89, %p90
      %s93 = sadd.s32 %s92, 1
      %p96 = scmp.eq.s32.totalorder %s16, 1
      %p97 = scmp.ne.s32.totalorder %s92, %s94
      %p98 = scmp.eq.s32.totalorder %s16, 0
      %p99 = por %p97, %p98
      %p100 = scmp.ne.s32.totalorder %s92, %s94
      %p101 = scmp.eq.s32.totalorder %s21, 1
      %p102 = por %p100, %p101
      %p103 = scmp.ne.s32.totalorder %s94, %s95
      %p104 = scmp.eq.s32.totalorder %s21, 0
      %p105 = por %p103, %p104
      %p106 = scmp.ne.s32.totalorder %s94, %s95
      %p107 = scmp.eq.s32.totalorder %s22, 1
      %p108 = por %p106, %p107
      %p110 = scmp.ne.s32.totalorder %s95, %s109
      %p111 = scmp.eq.s32.totalorder %s22, 0
      %p112 = por %p110, %p111
      %s114 = sadd.s32 %s113, 1
      %p117 = scmp.eq.s32.totalorder %s16, 1
      %p118 = scmp.ne.s32.totalorder %s113, %s115
      %p119 = scmp.eq.s32.totalorder %s16, 0
      %p120 = por %p118, %p119
      %p121 = scmp.ne.s32.totalorder %s113, %s115
      %p122 = scmp.eq.s32.totalorder %s21, 1
      %p123 = por %p121, %p122
      %p124 = scmp.ne.s32.totalorder %s115, %s116
      %p125 = scmp.eq.s32.totalorder %s21, 0
      %p126 = por %p124, %p125
      %p127 = scmp.ne.s32.totalorder %s115, %s116
      %p128 = scmp.eq.s32.totalorder %s22, 1
      %p129 = por %p127, %p128
      %p131 = scmp.ne.s32.totalorder %s116, %s130
      %p132 = scmp.eq.s32.totalorder %s22, 0
      %p133 = por %p131, %p132
      %s135 = sadd.s32 %s134, 1
      %p138 = scmp.eq.s32.totalorder %s16, 1
      %p139 = scmp.ne.s32.totalorder %s134, %s136
      %p140 = scmp.eq.s32.totalorder %s16, 0
      %p141 = por %p139, %p140
      %p142 = scmp.ne.s32.totalorder %s134, %s136
      %p143 = scmp.eq.s32.totalorder %s21, 1
      %p144 = por %p142, %p143
      %p145 = scmp.ne.s32.totalorder %s136, %s137
      %p146 = scmp.eq.s32.totalorder %s21, 0
      %p147 = por %p145, %p146
      %p148 = scmp.ne.s32.totalorder %s136, %s137
      %p149 = scmp.eq.s32.totalorder %s22, 1
      %p150 = por %p148, %p149
      %p152 = scmp.ne.s32.totalorder %s137, %s151
      %p153 = scmp.eq.s32.totalorder %s22, 0
      %p154 = por %p152, %p153
      %s156 = sadd.s32 %s155, 1
      %p159 = scmp.eq.s32.totalorder %s16, 1
      %p160 = scmp.ne.s32.totalorder %s155, %s157
      %p161 = scmp.eq.s32.totalorder %s16, 0
      %p162 = por %p160, %p161
      %p163 = scmp.ne.s32.totalorder %s155, %s157
      %p164 = scmp.eq.s32.totalorder %s21, 1
      %p165 = por %p163, %p164
      %p166 = scmp.ne.s32.totalorder %s157, %s158
      %p167 = scmp.eq.s32.totalorder %s21, 0
      %p168 = por %p166, %p167
      %p169 = scmp.ne.s32.totalorder %s157, %s158
      %p170 = scmp.eq.s32.totalorder %s22, 1
      %p171 = por %p169, %p170
      %p173 = scmp.ne.s32.totalorder %s158, %s172
      %p174 = scmp.eq.s32.totalorder %s22, 0
      %p175 = por %p173, %p174
      %s176 = ssub.s32 %s16, %s23
      %p177 = scmp.eq.s32.totalorder %s176, 0
      %s179 = sadd.s32 %s178, 1
      %s180 = scalar_select %p177, %s178, %s179
      %p183 = pneg %p177
      %p184 = scmp.eq.s32.totalorder %s16, 1
      %p185 = por %p183, %p184
      %p186 = scmp.ne.s32.totalorder %s178, %s181
      %p187 = scmp.eq.s32.totalorder %s16, 0
      %p188 = por %p186, %p187
      %p189 = scmp.ne.s32.totalorder %s178, %s181
      %p190 = scmp.eq.s32.totalorder %s21, 1
      %p191 = por %p189, %p190
      %p192 = scmp.ne.s32.totalorder %s181, %s182
      %p193 = scmp.eq.s32.totalorder %s21, 0
      %p194 = por %p192, %p193
      %p195 = scmp.ne.s32.totalorder %s181, %s182
      %p196 = scmp.eq.s32.totalorder %s22, 1
      %p197 = por %p195, %p196
      %p199 = scmp.ne.s32.totalorder %s182, %s198
      %p200 = scmp.eq.s32.totalorder %s22, 0
      %p201 = por %p199, %p200
      %p202 = scmp.le.s32.totalorder 1, %s16
      %p203 = scmp.lt.s32.totalorder %s16, 3
      %p204 = pnand %p202, %p203
      %p205 = pneg %p204
      // Predicated region
      $region9: #{tpu_custom_call.1} parent=5 // pred_check
        _
      $region10: #{tpu_custom_call.1} parent=5 // pred_check_branch
        %207 = sbr.rel (%p204) target = $region12
      $region11: #{tpu_custom_call.1} parent=5 // pred_region
        %s208 = ssub.s32 %s16, 1
        // Predicated region
        $region13: #{tpu_custom_call.1} parent=11 // pred_check
          %p209 = pneg %p63
        $region14: #{tpu_custom_call.1} parent=11 // pred_check_branch
          %211 = sbr.rel (%p209) target = $region16
        $region15: #{tpu_custom_call.1} parent=11 // pred_region
          _
        $region16: #{tpu_custom_call.1} parent=11 // pred_fallthru
          _
        // Predicated region
        $region17: #{tpu_custom_call.1} parent=11 // pred_check
          %p212 = pneg %p84
        $region18: #{tpu_custom_call.1} parent=11 // pred_check_branch
          %214 = sbr.rel (%p212) target = $region20
        $region19: #{tpu_custom_call.1} parent=11 // pred_region
          _
        $region20: #{tpu_custom_call.1} parent=11 // pred_fallthru
          _
        // Predicated region
        $region21: #{tpu_custom_call.1} parent=11 // pred_check
          %p215 = pneg %p105
        $region22: #{tpu_custom_call.1} parent=11 // pred_check_branch
          %217 = sbr.rel (%p215) target = $region24
        $region23: #{tpu_custom_call.1} parent=11 // pred_region
          _
        $region24: #{tpu_custom_call.1} parent=11 // pred_fallthru
          _
        // Predicated region
        $region25: #{tpu_custom_call.1} parent=11 // pred_check
          %p218 = pneg %p126
        $region26: #{tpu_custom_call.1} parent=11 // pred_check_branch
          %220 = sbr.rel (%p218) target = $region28
        $region27: #{tpu_custom_call.1} parent=11 // pred_region
          _
        $region28: #{tpu_custom_call.1} parent=11 // pred_fallthru
          _
        // Predicated region
        $region29: #{tpu_custom_call.1} parent=11 // pred_check
          %p221 = pneg %p147
        $region30: #{tpu_custom_call.1} parent=11 // pred_check_branch
          %223 = sbr.rel (%p221) target = $region32
        $region31: #{tpu_custom_call.1} parent=11 // pred_region
          _
        $region32: #{tpu_custom_call.1} parent=11 // pred_fallthru
          _
        // Predicated region
        $region33: #{tpu_custom_call.1} parent=11 // pred_check
          %p224 = pneg %p168
        $region34: #{tpu_custom_call.1} parent=11 // pred_check_branch
          %226 = sbr.rel (%p224) target = $region36
        $region35: #{tpu_custom_call.1} parent=11 // pred_region
          _
        $region36: #{tpu_custom_call.1} parent=11 // pred_fallthru
          _
      $region12: #{tpu_custom_call.1} parent=5 // pred_fallthru
        _
      %p227 = scmp.lt.s32.totalorder %s16, 2
      // Predicated region
      $region37: #{tpu_custom_call.1} parent=5 // pred_check
        %p228 = pneg %p227
      $region38: #{tpu_custom_call.1} parent=5 // pred_check_branch
        %230 = sbr.rel (%p228) target = $region40
      $region39: #{tpu_custom_call.1} parent=5 // pred_region
        // Predicated region
        $region41: #{tpu_custom_call.1} parent=39 // pred_check
          %p231 = pneg %p36
        $region42: #{tpu_custom_call.1} parent=39 // pred_check_branch
          %233 = sbr.rel (%p231) target = $region44
        $region43: #{tpu_custom_call.1} parent=39 // pred_region
          %s234 = smul.u32 64, %s16
          %p235 = scmp.lt.s32.totalorder %s234, 127
          %s236 = scalar_select %p235, %s234, 127
          %s237 = smul.addr %s236, 4
          %s238 = scalar_lea.vmem %s0, %s237
          %s239 = smul.u32 64, %s16
        $region44: #{tpu_custom_call.1} parent=39 // pred_fallthru
          _
      $region40: #{tpu_custom_call.1} parent=5 // pred_fallthru
        _
      %p240 = scmp.le.s32.totalorder 1, %s16
      %p241 = scmp.lt.s32.totalorder %s16, 3
      %p242 = pnand %p240, %p241
      %p243 = pneg %p242
      // Predicated region
      $region45: #{tpu_custom_call.1} parent=5 // pred_check
        _
      $region46: #{tpu_custom_call.1} parent=5 // pred_check_branch
        %245 = sbr.rel (%p242) target = $region48
      $region47: #{tpu_custom_call.1} parent=5 // pred_region
        %s246 = ssub.s32 %s16, 1
        %s247 = smul.u32 64, %s21
        %p248 = scmp.lt.s32.totalorder %s247, 127
        %s249 = scalar_select %p248, %s247, 127
        %s250 = smul.addr %s249, 4
        %s251 = scalar_lea.vmem %s0, %s250
        %p252 = pneg %p42
        %p253 = pneg %p39
        %p254 = pneg %p63
        %p255 = pneg %p60
        %p256 = pneg %p84
        %p257 = pneg %p81
        %p258 = pneg %p105
        %p259 = pneg %p102
        %p260 = pneg %p126
        %p261 = pneg %p123
        %p262 = pneg %p147
        %p263 = pneg %p144
        %p264 = pneg %p168
        %p265 = pneg %p165
        %p266 = pneg %p194
        %p267 = pneg %p191
        %s268 = sand.u32 %s181, 1
        %s269 = scalar_lea.sflag [#allocation3], %s268
        %s270 = sand.u32 %s181, 1
        %s271 = smul.addr %s270, 512
        %s272 = scalar_lea.vmem [#allocation2], %s271
        %s273 = smul.u32 64, %s21
        %p274 = scmp.lt.s32.totalorder %s273, 127
        %s275 = scalar_select %p274, %s273, 127
        %s276 = smul.addr %s275, 4
        %s277 = scalar_lea.vmem %s0, %s276
        %s278 = smul.u32 64, %s21
        %s279 = smul.u32 64, %s21
        %v281 = vld [vmem:[%s277] sm:$0xf]
        %v282 = vld [vmem:[%s277 + $0x4] sm:$0xf]
        %v283 = vld [vmem:[%s277 + $0x8] sm:$0xf]
        %v284 = vld [vmem:[%s277 + $0xc] sm:$0xf]
        %v285 = vld [vmem:[%s277 + $0x10] sm:$0xf]
        %v286 = vld [vmem:[%s277 + $0x14] sm:$0xf]
        %v287 = vld [vmem:[%s277 + $0x18] sm:$0xf]
        %v288 = vld [vmem:[%s277 + $0x1c] sm:$0xf]
        %v289 = vld [vmem:[%s277 + $0x20] sm:$0xf]
        %v290 = vld [vmem:[%s277 + $0x24] sm:$0xf]
        %v291 = vld [vmem:[%s277 + $0x28] sm:$0xf]
        %v292 = vld [vmem:[%s277 + $0x2c] sm:$0xf]
        %v293 = vld [vmem:[%s277 + $0x30] sm:$0xf]
        %v294 = vld [vmem:[%s277 + $0x34] sm:$0xf]
        %v295 = vld [vmem:[%s277 + $0x38] sm:$0xf]
        %v296 = vld [vmem:[%s277 + $0x3c] sm:$0xf]
        %v297 = vld [vmem:[%s277 + $0x40] sm:$0xf]
        %v298 = vld [vmem:[%s277 + $0x44] sm:$0xf]
        %v299 = vld [vmem:[%s277 + $0x48] sm:$0xf]
        %v300 = vld [vmem:[%s277 + $0x4c] sm:$0xf]
        %v301 = vld [vmem:[%s277 + $0x50] sm:$0xf]
        %v302 = vld [vmem:[%s277 + $0x54] sm:$0xf]
        %v303 = vld [vmem:[%s277 + $0x58] sm:$0xf]
        %v304 = vld [vmem:[%s277 + $0x5c] sm:$0xf]
        %v305 = vld [vmem:[%s277 + $0x60] sm:$0xf]
        %v306 = vld [vmem:[%s277 + $0x64] sm:$0xf]
        %v307 = vld [vmem:[%s277 + $0x68] sm:$0xf]
        %v308 = vld [vmem:[%s277 + $0x6c] sm:$0xf]
        %v309 = vld [vmem:[%s277 + $0x70] sm:$0xf]
        %v310 = vld [vmem:[%s277 + $0x74] sm:$0xf]
        %v311 = vld [vmem:[%s277 + $0x78] sm:$0xf]
        %v312 = vld [vmem:[%s277 + $0x7c] sm:$0xf]
        %v313 = vld [vmem:[%s277 + $0x80] sm:$0xf]
        %v314 = vld [vmem:[%s277 + $0x84] sm:$0xf]
        %v315 = vld [vmem:[%s277 + $0x88] sm:$0xf]
        %v316 = vld [vmem:[%s277 + $0x8c] sm:$0xf]
        %v317 = vld [vmem:[%s277 + $0x90] sm:$0xf]
        %v318 = vld [vmem:[%s277 + $0x94] sm:$0xf]
        %v319 = vld [vmem:[%s277 + $0x98] sm:$0xf]
        %v320 = vld [vmem:[%s277 + $0x9c] sm:$0xf]
        %v321 = vld [vmem:[%s277 + $0xa0] sm:$0xf]
        %v322 = vld [vmem:[%s277 + $0xa4] sm:$0xf]
        %v323 = vld [vmem:[%s277 + $0xa8] sm:$0xf]
        %v324 = vld [vmem:[%s277 + $0xac] sm:$0xf]
        %v325 = vld [vmem:[%s277 + $0xb0] sm:$0xf]
        %v326 = vld [vmem:[%s277 + $0xb4] sm:$0xf]
        %v327 = vld [vmem:[%s277 + $0xb8] sm:$0xf]
        %v328 = vld [vmem:[%s277 + $0xbc] sm:$0xf]
        %v329 = vld [vmem:[%s277 + $0xc0] sm:$0xf]
        %v330 = vld [vmem:[%s277 + $0xc4] sm:$0xf]
        %v331 = vld [vmem:[%s277 + $0xc8] sm:$0xf]
        %v332 = vld [vmem:[%s277 + $0xcc] sm:$0xf]
        %v333 = vld [vmem:[%s277 + $0xd0] sm:$0xf]
        %v334 = vld [vmem:[%s277 + $0xd4] sm:$0xf]
        %v335 = vld [vmem:[%s277 + $0xd8] sm:$0xf]
        %v336 = vld [vmem:[%s277 + $0xdc] sm:$0xf]
        %v337 = vld [vmem:[%s277 + $0xe0] sm:$0xf]
        %v338 = vld [vmem:[%s277 + $0xe4] sm:$0xf]
        %v339 = vld [vmem:[%s277 + $0xe8] sm:$0xf]
        %v340 = vld [vmem:[%s277 + $0xec] sm:$0xf]
        %v341 = vld [vmem:[%s277 + $0xf0] sm:$0xf]
        %v342 = vld [vmem:[%s277 + $0xf4] sm:$0xf]
        %v343 = vld [vmem:[%s277 + $0xf8] sm:$0xf]
        %v344 = vld [vmem:[%s277 + $0xfc] sm:$0xf]
        %v345 = vld [vmem:[%s1] sm:$0xff]
        %v346 = vld [vmem:[%s1 + $0x8] sm:$0xff]
        %v347 = vld [vmem:[%s1 + $0x10] sm:$0x33]
        %v348 = vld [vmem:[%s2] sm:$0x3]
        %v350 = vlaneseq
        %v351 = vshrl.u32 %v350, 7
        %v352 = vsub.s32 0, %v351
        %v353 = vrot.slane %v348, %v352
        %v354 = vlaneseq
        %v355 = vshrl.u32 %v354, 7
        %v356 = vsub.s32 1, %v355
        %v357 = vrot.slane %v348, %v356
        %v424 = vunpack.c.l.b16 %v281
        %v425 = vunpack.c.l.b16 %v282
        %v426 = vunpack.c.l.b16 %v283
        %v427 = vunpack.c.l.b16 %v284
        %v428 = vunpack.c.l.b16 %v285
        %v429 = vunpack.c.l.b16 %v286
        %v430 = vunpack.c.l.b16 %v287
        %v431 = vunpack.c.l.b16 %v288
        %v432 = vunpack.c.l.b16 %v289
        %v433 = vunpack.c.l.b16 %v290
        %v434 = vunpack.c.l.b16 %v291
        %v435 = vunpack.c.l.b16 %v292
        %v436 = vunpack.c.l.b16 %v293
        %v437 = vunpack.c.l.b16 %v294
        %v438 = vunpack.c.l.b16 %v295
        %v439 = vunpack.c.l.b16 %v296
        %v440 = vunpack.c.l.b16 %v297
        %v441 = vunpack.c.l.b16 %v298
        %v442 = vunpack.c.l.b16 %v299
        %v443 = vunpack.c.l.b16 %v300
        %v444 = vunpack.c.l.b16 %v301
        %v445 = vunpack.c.l.b16 %v302
        %v446 = vunpack.c.l.b16 %v303
        %v447 = vunpack.c.l.b16 %v304
        %v448 = vunpack.c.l.b16 %v305
        %v449 = vunpack.c.l.b16 %v306
        %v450 = vunpack.c.l.b16 %v307
        %v451 = vunpack.c.l.b16 %v308
        %v452 = vunpack.c.l.b16 %v309
        %v453 = vunpack.c.l.b16 %v310
        %v454 = vunpack.c.l.b16 %v311
        %v455 = vunpack.c.l.b16 %v312
        %v456 = vunpack.c.l.b16 %v313
        %v457 = vunpack.c.l.b16 %v314
        %v458 = vunpack.c.l.b16 %v315
        %v459 = vunpack.c.l.b16 %v316
        %v460 = vunpack.c.l.b16 %v317
        %v461 = vunpack.c.l.b16 %v318
        %v462 = vunpack.c.l.b16 %v319
        %v463 = vunpack.c.l.b16 %v320
        %v464 = vunpack.c.l.b16 %v321
        %v465 = vunpack.c.l.b16 %v322
        %v466 = vunpack.c.l.b16 %v323
        %v467 = vunpack.c.l.b16 %v324
        %v468 = vunpack.c.l.b16 %v325
        %v469 = vunpack.c.l.b16 %v326
        %v470 = vunpack.c.l.b16 %v327
        %v471 = vunpack.c.l.b16 %v328
        %v472 = vunpack.c.l.b16 %v329
        %v473 = vunpack.c.l.b16 %v330
        %v474 = vunpack.c.l.b16 %v331
        %v475 = vunpack.c.l.b16 %v332
        %v476 = vunpack.c.l.b16 %v333
        %v477 = vunpack.c.l.b16 %v334
        %v478 = vunpack.c.l.b16 %v335
        %v479 = vunpack.c.l.b16 %v336
        %v480 = vunpack.c.l.b16 %v337
        %v481 = vunpack.c.l.b16 %v338
        %v482 = vunpack.c.l.b16 %v339
        %v483 = vunpack.c.l.b16 %v340
        %v484 = vunpack.c.l.b16 %v341
        %v485 = vunpack.c.l.b16 %v342
        %v486 = vunpack.c.l.b16 %v343
        %v487 = vunpack.c.l.b16 %v344
        %v488 = vpack.c.b16 %v425, %v424
        %v489 = vpack.c.b16 %v427, %v426
        %v490 = vpack.c.b16 %v429, %v428
        %v491 = vpack.c.b16 %v431, %v430
        %v492 = vpack.c.b16 %v433, %v432
        %v493 = vpack.c.b16 %v435, %v434
        %v494 = vpack.c.b16 %v437, %v436
        %v495 = vpack.c.b16 %v439, %v438
        %v496 = vpack.c.b16 %v441, %v440
        %v497 = vpack.c.b16 %v443, %v442
        %v498 = vpack.c.b16 %v445, %v444
        %v499 = vpack.c.b16 %v447, %v446
        %v500 = vpack.c.b16 %v449, %v448
        %v501 = vpack.c.b16 %v451, %v450
        %v502 = vpack.c.b16 %v453, %v452
        %v503 = vpack.c.b16 %v455, %v454
        %v504 = vpack.c.b16 %v457, %v456
        %v505 = vpack.c.b16 %v459, %v458
        %v506 = vpack.c.b16 %v461, %v460
        %v507 = vpack.c.b16 %v463, %v462
        %v508 = vpack.c.b16 %v465, %v464
        %v509 = vpack.c.b16 %v467, %v466
        %v510 = vpack.c.b16 %v469, %v468
        %v511 = vpack.c.b16 %v471, %v470
        %v512 = vpack.c.b16 %v473, %v472
        %v513 = vpack.c.b16 %v475, %v474
        %v514 = vpack.c.b16 %v477, %v476
        %v515 = vpack.c.b16 %v479, %v478
        %v516 = vpack.c.b16 %v481, %v480
        %v517 = vpack.c.b16 %v483, %v482
        %v518 = vpack.c.b16 %v485, %v484
        %v519 = vpack.c.b16 %v487, %v486
        %v523 = vunpack.c.l.b16 %v345
        %v524 = vunpack.c.h.b16 %v345
        %v525 = vunpack.c.l.b16 %v346
        %v526 = vunpack.c.h.b16 %v346
        %v527 = vunpack.c.l.b16 %v347
        %v528 = vunpack.c.h.b16 %v347
        %v529 = vpack.c.b16 %v525, %v523
        %v530 = vpack.c.b16 %v526, %v524
        %v531 = vpack.c.b16 %v527, %v527
        %v532 = vpack.c.b16 %v528, %v528
        %vm535 = vcmask 162816
        %v537 = vsel %vm535, %v488, 0
        %v540 = vsel %vm535, %v489, 0
        %v543 = vsel %vm535, %v490, 0
        %v546 = vsel %vm535, %v491, 0
        %v549 = vsel %vm535, %v492, 0
        %v552 = vsel %vm535, %v493, 0
        %v555 = vsel %vm535, %v494, 0
        %v558 = vsel %vm535, %v495, 0
        %v561 = vsel %vm535, %v496, 0
        %v564 = vsel %vm535, %v497, 0
        %v567 = vsel %vm535, %v498, 0
        %v570 = vsel %vm535, %v499, 0
        %v573 = vsel %vm535, %v500, 0
        %v576 = vsel %vm535, %v501, 0
        %v579 = vsel %vm535, %v502, 0
        %v582 = vsel %vm535, %v503, 0
        %v585 = vsel %vm535, %v504, 0
        %v588 = vsel %vm535, %v505, 0
        %v591 = vsel %vm535, %v506, 0
        %v594 = vsel %vm535, %v507, 0
        %v597 = vsel %vm535, %v508, 0
        %v600 = vsel %vm535, %v509, 0
        %v603 = vsel %vm535, %v510, 0
        %v606 = vsel %vm535, %v511, 0
        %v609 = vsel %vm535, %v512, 0
        %v612 = vsel %vm535, %v513, 0
        %v615 = vsel %vm535, %v514, 0
        %v618 = vsel %vm535, %v515, 0
        %v621 = vsel %vm535, %v516, 0
        %v624 = vsel %vm535, %v517, 0
        %v627 = vsel %vm535, %v518, 0
        %v630 = vsel %vm535, %v519, 0
        %vm632 = vcmask 1041408
        %v634 = vsel %vm632, %v531, 0
        %v637 = vsel %vm632, %v532, 0
        %639 = vmatprep.subr.bf16.mxu0 0
        %640 = vmatpush1.bf16.msra.mxu0 0
        %641 = vmatprep.subr.bf16.mxu0 0
        %642 = vmatpush1.bf16.msra.mxu0 0
        %643 = vmatprep.subr.bf16.mxu0 0
        %644 = vmatpush1.bf16.msra.mxu0 0
        %645 = vmatprep.subr.bf16.mxu0 0
        %646 = vmatpush1.bf16.msra.mxu0 0
        %647 = vmatprep.subr.bf16.mxu0 0
        %648 = vmatpush1.bf16.msra.mxu0 0
        %649 = vmatprep.subr.bf16.mxu0 0
        %650 = vmatpush1.bf16.msra.mxu0 0
        %651 = vmatprep.subr.bf16.mxu0 %v637
        %652 = vmatpush1.bf16.msra.mxu0 %v634
        %653 = vmatprep.subr.bf16.mxu0 %v530
        %654 = vmatpush1.bf16.msra.mxu0 %v529
        %655 = vmatprep.subr.bf16.mxu0 0
        %656 = vmatpush2.bf16.msra.mxu0 0
        %657 = vmatprep.subr.bf16.mxu0 0
        %658 = vmatpush2.bf16.msra.mxu0 0
        %659 = vmatprep.subr.bf16.mxu0 0
        %660 = vmatpush2.bf16.msra.mxu0 0
        %661 = vmatprep.subr.bf16.mxu0 0
        %662 = vmatpush2.bf16.msra.mxu0 0
        %663 = vmatprep.subr.bf16.mxu0 0
        %664 = vmatpush2.bf16.msra.mxu0 0
        %665 = vmatprep.subr.bf16.mxu0 0
        %666 = vmatpush2.bf16.msra.mxu0 0
        %667 = vmatprep.subr.bf16.mxu0 0
        %668 = vmatpush2.bf16.msra.mxu0 0
        %669 = vmatprep.subr.bf16.mxu0 0
        %670 = vmatpush2.bf16.msra.mxu0 0
        %671 = vmatprep.mubr.bf16.mxu0 0
        %672 = vmatmul.mubr.bf16.gmra.mxu0 %v537
        %v673 = vpop.f32.mrf.mxu0
        %v674 = vadd.f32 %v353, %v673
        %v675 = vpop.f32.mrf.mxu0
        %v676 = vadd.f32 %v357, %v675
        %v677 = vpop.f32.mrf.mxu0
        %v678 = vadd.f32 %v353, %v677
        %v679 = vpop.f32.mrf.mxu0
        %v680 = vadd.f32 %v357, %v679
        %681 = vmatprep.mubr.bf16.mxu0 0
        %682 = vmatmul.mubr.bf16.gmra.mxu0 %v540
        %v683 = vpop.f32.mrf.mxu0
        %v684 = vadd.f32 %v353, %v683
        %v685 = vpop.f32.mrf.mxu0
        %v686 = vadd.f32 %v357, %v685
        %v687 = vpop.f32.mrf.mxu0
        %v688 = vadd.f32 %v353, %v687
        %v689 = vpop.f32.mrf.mxu0
        %v690 = vadd.f32 %v357, %v689
        %691 = vmatprep.mubr.bf16.mxu0 0
        %692 = vmatmul.mubr.bf16.gmra.mxu0 %v543
        %v693 = vpop.f32.mrf.mxu0
        %v694 = vadd.f32 %v353, %v693
        %v695 = vpop.f32.mrf.mxu0
        %v696 = vadd.f32 %v357, %v695
        %v697 = vpop.f32.mrf.mxu0
        %v698 = vadd.f32 %v353, %v697
        %v699 = vpop.f32.mrf.mxu0
        %v700 = vadd.f32 %v357, %v699
        %701 = vmatprep.mubr.bf16.mxu0 0
        %702 = vmatmul.mubr.bf16.gmra.mxu0 %v546
        %v703 = vpop.f32.mrf.mxu0
        %v704 = vadd.f32 %v353, %v703
        %v705 = vpop.f32.mrf.mxu0
        %v706 = vadd.f32 %v357, %v705
        %v707 = vpop.f32.mrf.mxu0
        %v708 = vadd.f32 %v353, %v707
        %v709 = vpop.f32.mrf.mxu0
        %v710 = vadd.f32 %v357, %v709
        %711 = vmatprep.mubr.bf16.mxu0 0
        %712 = vmatmul.mubr.bf16.gmra.mxu0 %v549
        %v713 = vpop.f32.mrf.mxu0
        %v714 = vadd.f32 %v353, %v713
        %v715 = vpop.f32.mrf.mxu0
        %v716 = vadd.f32 %v357, %v715
        %v717 = vpop.f32.mrf.mxu0
        %v718 = vadd.f32 %v353, %v717
        %v719 = vpop.f32.mrf.mxu0
        %v720 = vadd.f32 %v357, %v719
        %721 = vmatprep.mubr.bf16.mxu0 0
        %722 = vmatmul.mubr.bf16.gmra.mxu0 %v552
        %v723 = vpop.f32.mrf.mxu0
        %v724 = vadd.f32 %v353, %v723
        %v725 = vpop.f32.mrf.mxu0
        %v726 = vadd.f32 %v357, %v725
        %v727 = vpop.f32.mrf.mxu0
        %v728 = vadd.f32 %v353, %v727
        %v729 = vpop.f32.mrf.mxu0
        %v730 = vadd.f32 %v357, %v729
        %731 = vmatprep.mubr.bf16.mxu0 0
        %732 = vmatmul.mubr.bf16.gmra.mxu0 %v555
        %v733 = vpop.f32.mrf.mxu0
        %v734 = vadd.f32 %v353, %v733
        %v735 = vpop.f32.mrf.mxu0
        %v736 = vadd.f32 %v357, %v735
        %v737 = vpop.f32.mrf.mxu0
        %v738 = vadd.f32 %v353, %v737
        %v739 = vpop.f32.mrf.mxu0
        %v740 = vadd.f32 %v357, %v739
        %741 = vmatprep.mubr.bf16.mxu0 0
        %742 = vmatmul.mubr.bf16.gmra.mxu0 %v558
        %v743 = vpop.f32.mrf.mxu0
        %v744 = vadd.f32 %v353, %v743
        %v745 = vpop.f32.mrf.mxu0
        %v746 = vadd.f32 %v357, %v745
        %v747 = vpop.f32.mrf.mxu0
        %v748 = vadd.f32 %v353, %v747
        %v749 = vpop.f32.mrf.mxu0
        %v750 = vadd.f32 %v357, %v749
        %751 = vmatprep.mubr.bf16.mxu0 0
        %752 = vmatmul.mubr.bf16.gmra.mxu0 %v561
        %v753 = vpop.f32.mrf.mxu0
        %v754 = vadd.f32 %v353, %v753
        %v755 = vpop.f32.mrf.mxu0
        %v756 = vadd.f32 %v357, %v755
        %v757 = vpop.f32.mrf.mxu0
        %v758 = vadd.f32 %v353, %v757
        %v759 = vpop.f32.mrf.mxu0
        %v760 = vadd.f32 %v357, %v759
        %761 = vmatprep.mubr.bf16.mxu0 0
        %762 = vmatmul.mubr.bf16.gmra.mxu0 %v564
        %v763 = vpop.f32.mrf.mxu0
        %v764 = vadd.f32 %v353, %v763
        %v765 = vpop.f32.mrf.mxu0
        %v766 = vadd.f32 %v357, %v765
        %v767 = vpop.f32.mrf.mxu0
        %v768 = vadd.f32 %v353, %v767
        %v769 = vpop.f32.mrf.mxu0
        %v770 = vadd.f32 %v357, %v769
        %771 = vmatprep.mubr.bf16.mxu0 0
        %772 = vmatmul.mubr.bf16.gmra.mxu0 %v567
        %v773 = vpop.f32.mrf.mxu0
        %v774 = vadd.f32 %v353, %v773
        %v775 = vpop.f32.mrf.mxu0
        %v776 = vadd.f32 %v357, %v775
        %v777 = vpop.f32.mrf.mxu0
        %v778 = vadd.f32 %v353, %v777
        %v779 = vpop.f32.mrf.mxu0
        %v780 = vadd.f32 %v357, %v779
        %781 = vmatprep.mubr.bf16.mxu0 0
        %782 = vmatmul.mubr.bf16.gmra.mxu0 %v570
        %v783 = vpop.f32.mrf.mxu0
        %v784 = vadd.f32 %v353, %v783
        %v785 = vpop.f32.mrf.mxu0
        %v786 = vadd.f32 %v357, %v785
        %v787 = vpop.f32.mrf.mxu0
        %v788 = vadd.f32 %v353, %v787
        %v789 = vpop.f32.mrf.mxu0
        %v790 = vadd.f32 %v357, %v789
        %791 = vmatprep.mubr.bf16.mxu0 0
        %792 = vmatmul.mubr.bf16.gmra.mxu0 %v573
        %v793 = vpop.f32.mrf.mxu0
        %v794 = vadd.f32 %v353, %v793
        %v795 = vpop.f32.mrf.mxu0
        %v796 = vadd.f32 %v357, %v795
        %v797 = vpop.f32.mrf.mxu0
        %v798 = vadd.f32 %v353, %v797
        %v799 = vpop.f32.mrf.mxu0
        %v800 = vadd.f32 %v357, %v799
        %801 = vmatprep.mubr.bf16.mxu0 0
        %802 = vmatmul.mubr.bf16.gmra.mxu0 %v576
        %v803 = vpop.f32.mrf.mxu0
        %v804 = vadd.f32 %v353, %v803
        %v805 = vpop.f32.mrf.mxu0
        %v806 = vadd.f32 %v357, %v805
        %v807 = vpop.f32.mrf.mxu0
        %v808 = vadd.f32 %v353, %v807
        %v809 = vpop.f32.mrf.mxu0
        %v810 = vadd.f32 %v357, %v809
        %811 = vmatprep.mubr.bf16.mxu0 0
        %812 = vmatmul.mubr.bf16.gmra.mxu0 %v579
        %v813 = vpop.f32.mrf.mxu0
        %v814 = vadd.f32 %v353, %v813
        %v815 = vpop.f32.mrf.mxu0
        %v816 = vadd.f32 %v357, %v815
        %v817 = vpop.f32.mrf.mxu0
        %v818 = vadd.f32 %v353, %v817
        %v819 = vpop.f32.mrf.mxu0
        %v820 = vadd.f32 %v357, %v819
        %821 = vmatprep.mubr.bf16.mxu0 0
        %822 = vmatmul.mubr.bf16.gmra.mxu0 %v582
        %v823 = vpop.f32.mrf.mxu0
        %v824 = vadd.f32 %v353, %v823
        %v825 = vpop.f32.mrf.mxu0
        %v826 = vadd.f32 %v357, %v825
        %v827 = vpop.f32.mrf.mxu0
        %v828 = vadd.f32 %v353, %v827
        %v829 = vpop.f32.mrf.mxu0
        %v830 = vadd.f32 %v357, %v829
        %831 = vmatprep.mubr.bf16.mxu0 0
        %832 = vmatmul.mubr.bf16.gmra.mxu0 %v585
        %v833 = vpop.f32.mrf.mxu0
        %v834 = vadd.f32 %v353, %v833
        %v835 = vpop.f32.mrf.mxu0
        %v836 = vadd.f32 %v357, %v835
        %v837 = vpop.f32.mrf.mxu0
        %v838 = vadd.f32 %v353, %v837
        %v839 = vpop.f32.mrf.mxu0
        %v840 = vadd.f32 %v357, %v839
        %841 = vmatprep.mubr.bf16.mxu0 0
        %842 = vmatmul.mubr.bf16.gmra.mxu0 %v588
        %v843 = vpop.f32.mrf.mxu0
        %v844 = vadd.f32 %v353, %v843
        %v845 = vpop.f32.mrf.mxu0
        %v846 = vadd.f32 %v357, %v845
        %v847 = vpop.f32.mrf.mxu0
        %v848 = vadd.f32 %v353, %v847
        %v849 = vpop.f32.mrf.mxu0
        %v850 = vadd.f32 %v357, %v849
        %851 = vmatprep.mubr.bf16.mxu0 0
        %852 = vmatmul.mubr.bf16.gmra.mxu0 %v591
        %v853 = vpop.f32.mrf.mxu0
        %v854 = vadd.f32 %v353, %v853
        %v855 = vpop.f32.mrf.mxu0
        %v856 = vadd.f32 %v357, %v855
        %v857 = vpop.f32.mrf.mxu0
        %v858 = vadd.f32 %v353, %v857
        %v859 = vpop.f32.mrf.mxu0
        %v860 = vadd.f32 %v357, %v859
        %861 = vmatprep.mubr.bf16.mxu0 0
        %862 = vmatmul.mubr.bf16.gmra.mxu0 %v594
        %v863 = vpop.f32.mrf.mxu0
        %v864 = vadd.f32 %v353, %v863
        %v865 = vpop.f32.mrf.mxu0
        %v866 = vadd.f32 %v357, %v865
        %v867 = vpop.f32.mrf.mxu0
        %v868 = vadd.f32 %v353, %v867
        %v869 = vpop.f32.mrf.mxu0
        %v870 = vadd.f32 %v357, %v869
        %871 = vmatprep.mubr.bf16.mxu0 0
        %872 = vmatmul.mubr.bf16.gmra.mxu0 %v597
        %v873 = vpop.f32.mrf.mxu0
        %v874 = vadd.f32 %v353, %v873
        %v875 = vpop.f32.mrf.mxu0
        %v876 = vadd.f32 %v357, %v875
        %v877 = vpop.f32.mrf.mxu0
        %v878 = vadd.f32 %v353, %v877
        %v879 = vpop.f32.mrf.mxu0
        %v880 = vadd.f32 %v357, %v879
        %881 = vmatprep.mubr.bf16.mxu0 0
        %882 = vmatmul.mubr.bf16.gmra.mxu0 %v600
        %v883 = vpop.f32.mrf.mxu0
        %v884 = vadd.f32 %v353, %v883
        %v885 = vpop.f32.mrf.mxu0
        %v886 = vadd.f32 %v357, %v885
        %v887 = vpop.f32.mrf.mxu0
        %v888 = vadd.f32 %v353, %v887
        %v889 = vpop.f32.mrf.mxu0
        %v890 = vadd.f32 %v357, %v889
        %891 = vmatprep.mubr.bf16.mxu0 0
        %892 = vmatmul.mubr.bf16.gmra.mxu0 %v603
        %v893 = vpop.f32.mrf.mxu0
        %v894 = vadd.f32 %v353, %v893
        %v895 = vpop.f32.mrf.mxu0
        %v896 = vadd.f32 %v357, %v895
        %v897 = vpop.f32.mrf.mxu0
        %v898 = vadd.f32 %v353, %v897
        %v899 = vpop.f32.mrf.mxu0
        %v900 = vadd.f32 %v357, %v899
        %901 = vmatprep.mubr.bf16.mxu0 0
        %902 = vmatmul.mubr.bf16.gmra.mxu0 %v606
        %v903 = vpop.f32.mrf.mxu0
        %v904 = vadd.f32 %v353, %v903
        %v905 = vpop.f32.mrf.mxu0
        %v906 = vadd.f32 %v357, %v905
        %v907 = vpop.f32.mrf.mxu0
        %v908 = vadd.f32 %v353, %v907
        %v909 = vpop.f32.mrf.mxu0
        %v910 = vadd.f32 %v357, %v909
        %911 = vmatprep.mubr.bf16.mxu0 0
        %912 = vmatmul.mubr.bf16.gmra.mxu0 %v609
        %v913 = vpop.f32.mrf.mxu0
        %v914 = vadd.f32 %v353, %v913
        %v915 = vpop.f32.mrf.mxu0
        %v916 = vadd.f32 %v357, %v915
        %v917 = vpop.f32.mrf.mxu0
        %v918 = vadd.f32 %v353, %v917
        %v919 = vpop.f32.mrf.mxu0
        %v920 = vadd.f32 %v357, %v919
        %921 = vmatprep.mubr.bf16.mxu0 0
        %922 = vmatmul.mubr.bf16.gmra.mxu0 %v612
        %v923 = vpop.f32.mrf.mxu0
        %v924 = vadd.f32 %v353, %v923
        %v925 = vpop.f32.mrf.mxu0
        %v926 = vadd.f32 %v357, %v925
        %v927 = vpop.f32.mrf.mxu0
        %v928 = vadd.f32 %v353, %v927
        %v929 = vpop.f32.mrf.mxu0
        %v930 = vadd.f32 %v357, %v929
        %931 = vmatprep.mubr.bf16.mxu0 0
        %932 = vmatmul.mubr.bf16.gmra.mxu0 %v615
        %v933 = vpop.f32.mrf.mxu0
        %v934 = vadd.f32 %v353, %v933
        %v935 = vpop.f32.mrf.mxu0
        %v936 = vadd.f32 %v357, %v935
        %v937 = vpop.f32.mrf.mxu0
        %v938 = vadd.f32 %v353, %v937
        %v939 = vpop.f32.mrf.mxu0
        %v940 = vadd.f32 %v357, %v939
        %941 = vmatprep.mubr.bf16.mxu0 0
        %942 = vmatmul.mubr.bf16.gmra.mxu0 %v618
        %v943 = vpop.f32.mrf.mxu0
        %v944 = vadd.f32 %v353, %v943
        %v945 = vpop.f32.mrf.mxu0
        %v946 = vadd.f32 %v357, %v945
        %v947 = vpop.f32.mrf.mxu0
        %v948 = vadd.f32 %v353, %v947
        %v949 = vpop.f32.mrf.mxu0
        %v950 = vadd.f32 %v357, %v949
        %951 = vmatprep.mubr.bf16.mxu0 0
        %952 = vmatmul.mubr.bf16.gmra.mxu0 %v621
        %v953 = vpop.f32.mrf.mxu0
        %v954 = vadd.f32 %v353, %v953
        %v955 = vpop.f32.mrf.mxu0
        %v956 = vadd.f32 %v357, %v955
        %v957 = vpop.f32.mrf.mxu0
        %v958 = vadd.f32 %v353, %v957
        %v959 = vpop.f32.mrf.mxu0
        %v960 = vadd.f32 %v357, %v959
        %961 = vmatprep.mubr.bf16.mxu0 0
        %962 = vmatmul.mubr.bf16.gmra.mxu0 %v624
        %v963 = vpop.f32.mrf.mxu0
        %v964 = vadd.f32 %v353, %v963
        %v965 = vpop.f32.mrf.mxu0
        %v966 = vadd.f32 %v357, %v965
        %v967 = vpop.f32.mrf.mxu0
        %v968 = vadd.f32 %v353, %v967
        %v969 = vpop.f32.mrf.mxu0
        %v970 = vadd.f32 %v357, %v969
        %971 = vmatprep.mubr.bf16.mxu0 0
        %972 = vmatmul.mubr.bf16.gmra.mxu0 %v627
        %v973 = vpop.f32.mrf.mxu0
        %v974 = vadd.f32 %v353, %v973
        %v975 = vpop.f32.mrf.mxu0
        %v976 = vadd.f32 %v357, %v975
        %v977 = vpop.f32.mrf.mxu0
        %v978 = vadd.f32 %v353, %v977
        %v979 = vpop.f32.mrf.mxu0
        %v980 = vadd.f32 %v357, %v979
        %981 = vmatprep.mubr.bf16.mxu0 0
        %982 = vmatmul.mubr.bf16.gmra.mxu0 %v630
        %v983 = vpop.f32.mrf.mxu0
        %v984 = vadd.f32 %v353, %v983
        %v985 = vpop.f32.mrf.mxu0
        %v986 = vadd.f32 %v357, %v985
        %v987 = vpop.f32.mrf.mxu0
        %v988 = vadd.f32 %v353, %v987
        %v989 = vpop.f32.mrf.mxu0
        %v990 = vadd.f32 %v357, %v989
        %991 = vdwg.mxu0
        %v992 = vxor.u32 %v674, 2147483648
        %v993 = vxor.u32 %v676, 2147483648
        %v994 = vxor.u32 %v678, 2147483648
        %v995 = vxor.u32 %v680, 2147483648
        %v996 = vxor.u32 %v684, 2147483648
        %v997 = vxor.u32 %v686, 2147483648
        %v998 = vxor.u32 %v688, 2147483648
        %v999 = vxor.u32 %v690, 2147483648
        %v1000 = vxor.u32 %v694, 2147483648
        %v1001 = vxor.u32 %v696, 2147483648
        %v1002 = vxor.u32 %v698, 2147483648
        %v1003 = vxor.u32 %v700, 2147483648
        %v1004 = vxor.u32 %v704, 2147483648
        %v1005 = vxor.u32 %v706, 2147483648
        %v1006 = vxor.u32 %v708, 2147483648
        %v1007 = vxor.u32 %v710, 2147483648
        %v1008 = vxor.u32 %v714, 2147483648
        %v1009 = vxor.u32 %v716, 2147483648
        %v1010 = vxor.u32 %v718, 2147483648
        %v1011 = vxor.u32 %v720, 2147483648
        %v1012 = vxor.u32 %v724, 2147483648
        %v1013 = vxor.u32 %v726, 2147483648
        %v1014 = vxor.u32 %v728, 2147483648
        %v1015 = vxor.u32 %v730, 2147483648
        %v1016 = vxor.u32 %v734, 2147483648
        %v1017 = vxor.u32 %v736, 2147483648
        %v1018 = vxor.u32 %v738, 2147483648
        %v1019 = vxor.u32 %v740, 2147483648
        %v1020 = vxor.u32 %v744, 2147483648
        %v1021 = vxor.u32 %v746, 2147483648
        %v1022 = vxor.u32 %v748, 2147483648
        %v1023 = vxor.u32 %v750, 2147483648
        %v1024 = vxor.u32 %v754, 2147483648
        %v1025 = vxor.u32 %v756, 2147483648
        %v1026 = vxor.u32 %v758, 2147483648
        %v1027 = vxor.u32 %v760, 2147483648
        %v1028 = vxor.u32 %v764, 2147483648
        %v1029 = vxor.u32 %v766, 2147483648
        %v1030 = vxor.u32 %v768, 2147483648
        %v1031 = vxor.u32 %v770, 2147483648
        %v1032 = vxor.u32 %v774, 2147483648
        %v1033 = vxor.u32 %v776, 2147483648
        %v1034 = vxor.u32 %v778, 2147483648
        %v1035 = vxor.u32 %v780, 2147483648
        %v1036 = vxor.u32 %v784, 2147483648
        %v1037 = vxor.u32 %v786, 2147483648
        %v1038 = vxor.u32 %v788, 2147483648
        %v1039 = vxor.u32 %v790, 2147483648
        %v1040 = vxor.u32 %v794, 2147483648
        %v1041 = vxor.u32 %v796, 2147483648
        %v1042 = vxor.u32 %v798, 2147483648
        %v1043 = vxor.u32 %v800, 2147483648
        %v1044 = vxor.u32 %v804, 2147483648
        %v1045 = vxor.u32 %v806, 2147483648
        %v1046 = vxor.u32 %v808, 2147483648
        %v1047 = vxor.u32 %v810, 2147483648
        %v1048 = vxor.u32 %v814, 2147483648
        %v1049 = vxor.u32 %v816, 2147483648
        %v1050 = vxor.u32 %v818, 2147483648
        %v1051 = vxor.u32 %v820, 2147483648
        %v1052 = vxor.u32 %v824, 2147483648
        %v1053 = vxor.u32 %v826, 2147483648
        %v1054 = vxor.u32 %v828, 2147483648
        %v1055 = vxor.u32 %v830, 2147483648
        %v1056 = vxor.u32 %v834, 2147483648
        %v1057 = vxor.u32 %v836, 2147483648
        %v1058 = vxor.u32 %v838, 2147483648
        %v1059 = vxor.u32 %v840, 2147483648
        %v1060 = vxor.u32 %v844, 2147483648
        %v1061 = vxor.u32 %v846, 2147483648
        %v1062 = vxor.u32 %v848, 2147483648
        %v1063 = vxor.u32 %v850, 2147483648
        %v1064 = vxor.u32 %v854, 2147483648
        %v1065 = vxor.u32 %v856, 2147483648
        %v1066 = vxor.u32 %v858, 2147483648
        %v1067 = vxor.u32 %v860, 2147483648
        %v1068 = vxor.u32 %v864, 2147483648
        %v1069 = vxor.u32 %v866, 2147483648
        %v1070 = vxor.u32 %v868, 2147483648
        %v1071 = vxor.u32 %v870, 2147483648
        %v1072 = vxor.u32 %v874, 2147483648
        %v1073 = vxor.u32 %v876, 2147483648
        %v1074 = vxor.u32 %v878, 2147483648
        %v1075 = vxor.u32 %v880, 2147483648
        %v1076 = vxor.u32 %v884, 2147483648
        %v1077 = vxor.u32 %v886, 2147483648
        %v1078 = vxor.u32 %v888, 2147483648
        %v1079 = vxor.u32 %v890, 2147483648
        %v1080 = vxor.u32 %v894, 2147483648
        %v1081 = vxor.u32 %v896, 2147483648
        %v1082 = vxor.u32 %v898, 2147483648
        %v1083 = vxor.u32 %v900, 2147483648
        %v1084 = vxor.u32 %v904, 2147483648
        %v1085 = vxor.u32 %v906, 2147483648
        %v1086 = vxor.u32 %v908, 2147483648
        %v1087 = vxor.u32 %v910, 2147483648
        %v1088 = vxor.u32 %v914, 2147483648
        %v1089 = vxor.u32 %v916, 2147483648
        %v1090 = vxor.u32 %v918, 2147483648
        %v1091 = vxor.u32 %v920, 2147483648
        %v1092 = vxor.u32 %v924, 2147483648
        %v1093 = vxor.u32 %v926, 2147483648
        %v1094 = vxor.u32 %v928, 2147483648
        %v1095 = vxor.u32 %v930, 2147483648
        %v1096 = vxor.u32 %v934, 2147483648
        %v1097 = vxor.u32 %v936, 2147483648
        %v1098 = vxor.u32 %v938, 2147483648
        %v1099 = vxor.u32 %v940, 2147483648
        %v1100 = vxor.u32 %v944, 2147483648
        %v1101 = vxor.u32 %v946, 2147483648
        %v1102 = vxor.u32 %v948, 2147483648
        %v1103 = vxor.u32 %v950, 2147483648
        %v1104 = vxor.u32 %v954, 2147483648
        %v1105 = vxor.u32 %v956, 2147483648
        %v1106 = vxor.u32 %v958, 2147483648
        %v1107 = vxor.u32 %v960, 2147483648
        %v1108 = vxor.u32 %v964, 2147483648
        %v1109 = vxor.u32 %v966, 2147483648
        %v1110 = vxor.u32 %v968, 2147483648
        %v1111 = vxor.u32 %v970, 2147483648
        %v1112 = vxor.u32 %v974, 2147483648
        %v1113 = vxor.u32 %v976, 2147483648
        %v1114 = vxor.u32 %v978, 2147483648
        %v1115 = vxor.u32 %v980, 2147483648
        %v1116 = vxor.u32 %v984, 2147483648
        %v1117 = vxor.u32 %v986, 2147483648
        %v1118 = vxor.u32 %v988, 2147483648
        %v1119 = vxor.u32 %v990, 2147483648
        %v1120 = vmul.f32 %v992, 1.442695
        %v1121 = vpow.pop %v1120
        %v1122 = vmul.f32 %v993, 1.442695
        %v1123 = vpow.pop %v1122
        %v1124 = vmul.f32 %v994, 1.442695
        %v1125 = vpow.pop %v1124
        %v1126 = vmul.f32 %v995, 1.442695
        %v1127 = vpow.pop %v1126
        %v1128 = vmul.f32 %v996, 1.442695
        %v1129 = vpow.pop %v1128
        %v1130 = vmul.f32 %v997, 1.442695
        %v1131 = vpow.pop %v1130
        %v1132 = vmul.f32 %v998, 1.442695
        %v1133 = vpow.pop %v1132
        %v1134 = vmul.f32 %v999, 1.442695
        %v1135 = vpow.pop %v1134
        %v1136 = vmul.f32 %v1000, 1.442695
        %v1137 = vpow.pop %v1136
        %v1138 = vmul.f32 %v1001, 1.442695
        %v1139 = vpow.pop %v1138
        %v1140 = vmul.f32 %v1002, 1.442695
        %v1141 = vpow.pop %v1140
        %v1142 = vmul.f32 %v1003, 1.442695
        %v1143 = vpow.pop %v1142
        %v1144 = vmul.f32 %v1004, 1.442695
        %v1145 = vpow.pop %v1144
        %v1146 = vmul.f32 %v1005, 1.442695
        %v1147 = vpow.pop %v1146
        %v1148 = vmul.f32 %v1006, 1.442695
        %v1149 = vpow.pop %v1148
        %v1150 = vmul.f32 %v1007, 1.442695
        %v1151 = vpow.pop %v1150
        %v1152 = vmul.f32 %v1008, 1.442695
        %v1153 = vpow.pop %v1152
        %v1154 = vmul.f32 %v1009, 1.442695
        %v1155 = vpow.pop %v1154
        %v1156 = vmul.f32 %v1010, 1.442695
        %v1157 = vpow.pop %v1156
        %v1158 = vmul.f32 %v1011, 1.442695
        %v1159 = vpow.pop %v1158
        %v1160 = vmul.f32 %v1012, 1.442695
        %v1161 = vpow.pop %v1160
        %v1162 = vmul.f32 %v1013, 1.442695
        %v1163 = vpow.pop %v1162
        %v1164 = vmul.f32 %v1014, 1.442695
        %v1165 = vpow.pop %v1164
        %v1166 = vmul.f32 %v1015, 1.442695
        %v1167 = vpow.pop %v1166
        %v1168 = vmul.f32 %v1016, 1.442695
        %v1169 = vpow.pop %v1168
        %v1170 = vmul.f32 %v1017, 1.442695
        %v1171 = vpow.pop %v1170
        %v1172 = vmul.f32 %v1018, 1.442695
        %v1173 = vpow.pop %v1172
        %v1174 = vmul.f32 %v1019, 1.442695
        %v1175 = vpow.pop %v1174
        %v1176 = vmul.f32 %v1020, 1.442695
        %v1177 = vpow.pop %v1176
        %v1178 = vmul.f32 %v1021, 1.442695
        %v1179 = vpow.pop %v1178
        %v1180 = vmul.f32 %v1022, 1.442695
        %v1181 = vpow.pop %v1180
        %v1182 = vmul.f32 %v1023, 1.442695
        %v1183 = vpow.pop %v1182
        %v1184 = vmul.f32 %v1024, 1.442695
        %v1185 = vpow.pop %v1184
        %v1186 = vmul.f32 %v1025, 1.442695
        %v1187 = vpow.pop %v1186
        %v1188 = vmul.f32 %v1026, 1.442695
        %v1189 = vpow.pop %v1188
        %v1190 = vmul.f32 %v1027, 1.442695
        %v1191 = vpow.pop %v1190
        %v1192 = vmul.f32 %v1028, 1.442695
        %v1193 = vpow.pop %v1192
        %v1194 = vmul.f32 %v1029, 1.442695
        %v1195 = vpow.pop %v1194
        %v1196 = vmul.f32 %v1030, 1.442695
        %v1197 = vpow.pop %v1196
        %v1198 = vmul.f32 %v1031, 1.442695
        %v1199 = vpow.pop %v1198
        %v1200 = vmul.f32 %v1032, 1.442695
        %v1201 = vpow.pop %v1200
        %v1202 = vmul.f32 %v1033, 1.442695
        %v1203 = vpow.pop %v1202
        %v1204 = vmul.f32 %v1034, 1.442695
        %v1205 = vpow.pop %v1204
        %v1206 = vmul.f32 %v1035, 1.442695
        %v1207 = vpow.pop %v1206
        %v1208 = vmul.f32 %v1036, 1.442695
        %v1209 = vpow.pop %v1208
        %v1210 = vmul.f32 %v1037, 1.442695
        %v1211 = vpow.pop %v1210
        %v1212 = vmul.f32 %v1038, 1.442695
        %v1213 = vpow.pop %v1212
        %v1214 = vmul.f32 %v1039, 1.442695
        %v1215 = vpow.pop %v1214
        %v1216 = vmul.f32 %v1040, 1.442695
        %v1217 = vpow.pop %v1216
        %v1218 = vmul.f32 %v1041, 1.442695
        %v1219 = vpow.pop %v1218
        %v1220 = vmul.f32 %v1042, 1.442695
        %v1221 = vpow.pop %v1220
        %v1222 = vmul.f32 %v1043, 1.442695
        %v1223 = vpow.pop %v1222
        %v1224 = vmul.f32 %v1044, 1.442695
        %v1225 = vpow.pop %v1224
        %v1226 = vmul.f32 %v1045, 1.442695
        %v1227 = vpow.pop %v1226
        %v1228 = vmul.f32 %v1046, 1.442695
        %v1229 = vpow.pop %v1228
        %v1230 = vmul.f32 %v1047, 1.442695
        %v1231 = vpow.pop %v1230
        %v1232 = vmul.f32 %v1048, 1.442695
        %v1233 = vpow.pop %v1232
        %v1234 = vmul.f32 %v1049, 1.442695
        %v1235 = vpow.pop %v1234
        %v1236 = vmul.f32 %v1050, 1.442695
        %v1237 = vpow.pop %v1236
        %v1238 = vmul.f32 %v1051, 1.442695
        %v1239 = vpow.pop %v1238
        %v1240 = vmul.f32 %v1052, 1.442695
        %v1241 = vpow.pop %v1240
        %v1242 = vmul.f32 %v1053, 1.442695
        %v1243 = vpow.pop %v1242
        %v1244 = vmul.f32 %v1054, 1.442695
        %v1245 = vpow.pop %v1244
        %v1246 = vmul.f32 %v1055, 1.442695
        %v1247 = vpow.pop %v1246
        %v1248 = vmul.f32 %v1056, 1.442695
        %v1249 = vpow.pop %v1248
        %v1250 = vmul.f32 %v1057, 1.442695
        %v1251 = vpow.pop %v1250
        %v1252 = vmul.f32 %v1058, 1.442695
        %v1253 = vpow.pop %v1252
        %v1254 = vmul.f32 %v1059, 1.442695
        %v1255 = vpow.pop %v1254
        %v1256 = vmul.f32 %v1060, 1.442695
        %v1257 = vpow.pop %v1256
        %v1258 = vmul.f32 %v1061, 1.442695
        %v1259 = vpow.pop %v1258
        %v1260 = vmul.f32 %v1062, 1.442695
        %v1261 = vpow.pop %v1260
        %v1262 = vmul.f32 %v1063, 1.442695
        %v1263 = vpow.pop %v1262
        %v1264 = vmul.f32 %v1064, 1.442695
        %v1265 = vpow.pop %v1264
        %v1266 = vmul.f32 %v1065, 1.442695
        %v1267 = vpow.pop %v1266
        %v1268 = vmul.f32 %v1066, 1.442695
        %v1269 = vpow.pop %v1268
        %v1270 = vmul.f32 %v1067, 1.442695
        %v1271 = vpow.pop %v1270
        %v1272 = vmul.f32 %v1068, 1.442695
        %v1273 = vpow.pop %v1272
        %v1274 = vmul.f32 %v1069, 1.442695
        %v1275 = vpow.pop %v1274
        %v1276 = vmul.f32 %v1070, 1.442695
        %v1277 = vpow.pop %v1276
        %v1278 = vmul.f32 %v1071, 1.442695
        %v1279 = vpow.pop %v1278
        %v1280 = vmul.f32 %v1072, 1.442695
        %v1281 = vpow.pop %v1280
        %v1282 = vmul.f32 %v1073, 1.442695
        %v1283 = vpow.pop %v1282
        %v1284 = vmul.f32 %v1074, 1.442695
        %v1285 = vpow.pop %v1284
        %v1286 = vmul.f32 %v1075, 1.442695
        %v1287 = vpow.pop %v1286
        %v1288 = vmul.f32 %v1076, 1.442695
        %v1289 = vpow.pop %v1288
        %v1290 = vmul.f32 %v1077, 1.442695
        %v1291 = vpow.pop %v1290
        %v1292 = vmul.f32 %v1078, 1.442695
        %v1293 = vpow.pop %v1292
        %v1294 = vmul.f32 %v1079, 1.442695
        %v1295 = vpow.pop %v1294
        %v1296 = vmul.f32 %v1080, 1.442695
        %v1297 = vpow.pop %v1296
        %v1298 = vmul.f32 %v1081, 1.442695
        %v1299 = vpow.pop %v1298
        %v1300 = vmul.f32 %v1082, 1.442695
        %v1301 = vpow.pop %v1300
        %v1302 = vmul.f32 %v1083, 1.442695
        %v1303 = vpow.pop %v1302
        %v1304 = vmul.f32 %v1084, 1.442695
        %v1305 = vpow.pop %v1304
        %v1306 = vmul.f32 %v1085, 1.442695
        %v1307 = vpow.pop %v1306
        %v1308 = vmul.f32 %v1086, 1.442695
        %v1309 = vpow.pop %v1308
        %v1310 = vmul.f32 %v1087, 1.442695
        %v1311 = vpow.pop %v1310
        %v1312 = vmul.f32 %v1088, 1.442695
        %v1313 = vpow.pop %v1312
        %v1314 = vmul.f32 %v1089, 1.442695
        %v1315 = vpow.pop %v1314
        %v1316 = vmul.f32 %v1090, 1.442695
        %v1317 = vpow.pop %v1316
        %v1318 = vmul.f32 %v1091, 1.442695
        %v1319 = vpow.pop %v1318
        %v1320 = vmul.f32 %v1092, 1.442695
        %v1321 = vpow.pop %v1320
        %v1322 = vmul.f32 %v1093, 1.442695
        %v1323 = vpow.pop %v1322
        %v1324 = vmul.f32 %v1094, 1.442695
        %v1325 = vpow.pop %v1324
        %v1326 = vmul.f32 %v1095, 1.442695
        %v1327 = vpow.pop %v1326
        %v1328 = vmul.f32 %v1096, 1.442695
        %v1329 = vpow.pop %v1328
        %v1330 = vmul.f32 %v1097, 1.442695
        %v1331 = vpow.pop %v1330
        %v1332 = vmul.f32 %v1098, 1.442695
        %v1333 = vpow.pop %v1332
        %v1334 = vmul.f32 %v1099, 1.442695
        %v1335 = vpow.pop %v1334
        %v1336 = vmul.f32 %v1100, 1.442695
        %v1337 = vpow.pop %v1336
        %v1338 = vmul.f32 %v1101, 1.442695
        %v1339 = vpow.pop %v1338
        %v1340 = vmul.f32 %v1102, 1.442695
        %v1341 = vpow.pop %v1340
        %v1342 = vmul.f32 %v1103, 1.442695
        %v1343 = vpow.pop %v1342
        %v1344 = vmul.f32 %v1104, 1.442695
        %v1345 = vpow.pop %v1344
        %v1346 = vmul.f32 %v1105, 1.442695
        %v1347 = vpow.pop %v1346
        %v1348 = vmul.f32 %v1106, 1.442695
        %v1349 = vpow.pop %v1348
        %v1350 = vmul.f32 %v1107, 1.442695
        %v1351 = vpow.pop %v1350
        %v1352 = vmul.f32 %v1108, 1.442695
        %v1353 = vpow.pop %v1352
        %v1354 = vmul.f32 %v1109, 1.442695
        %v1355 = vpow.pop %v1354
        %v1356 = vmul.f32 %v1110, 1.442695
        %v1357 = vpow.pop %v1356
        %v1358 = vmul.f32 %v1111, 1.442695
        %v1359 = vpow.pop %v1358
        %v1360 = vmul.f32 %v1112, 1.442695
        %v1361 = vpow.pop %v1360
        %v1362 = vmul.f32 %v1113, 1.442695
        %v1363 = vpow.pop %v1362
        %v1364 = vmul.f32 %v1114, 1.442695
        %v1365 = vpow.pop %v1364
        %v1366 = vmul.f32 %v1115, 1.442695
        %v1367 = vpow.pop %v1366
        %v1368 = vmul.f32 %v1116, 1.442695
        %v1369 = vpow.pop %v1368
        %v1370 = vmul.f32 %v1117, 1.442695
        %v1371 = vpow.pop %v1370
        %v1372 = vmul.f32 %v1118, 1.442695
        %v1373 = vpow.pop %v1372
        %v1374 = vmul.f32 %v1119, 1.442695
        %v1375 = vpow.pop %v1374
        %v1376 = vadd.f32 %v1121, 1.0
        %v1377 = vadd.f32 %v1123, 1.0
        %v1378 = vadd.f32 %v1125, 1.0
        %v1379 = vadd.f32 %v1127, 1.0
        %v1380 = vadd.f32 %v1129, 1.0
        %v1381 = vadd.f32 %v1131, 1.0
        %v1382 = vadd.f32 %v1133, 1.0
        %v1383 = vadd.f32 %v1135, 1.0
        %v1384 = vadd.f32 %v1137, 1.0
        %v1385 = vadd.f32 %v1139, 1.0
        %v1386 = vadd.f32 %v1141, 1.0
        %v1387 = vadd.f32 %v1143, 1.0
        %v1388 = vadd.f32 %v1145, 1.0
        %v1389 = vadd.f32 %v1147, 1.0
        %v1390 = vadd.f32 %v1149, 1.0
        %v1391 = vadd.f32 %v1151, 1.0
        %v1392 = vadd.f32 %v1153, 1.0
        %v1393 = vadd.f32 %v1155, 1.0
        %v1394 = vadd.f32 %v1157, 1.0
        %v1395 = vadd.f32 %v1159, 1.0
        %v1396 = vadd.f32 %v1161, 1.0
        %v1397 = vadd.f32 %v1163, 1.0
        %v1398 = vadd.f32 %v1165, 1.0
        %v1399 = vadd.f32 %v1167, 1.0
        %v1400 = vadd.f32 %v1169, 1.0
        %v1401 = vadd.f32 %v1171, 1.0
        %v1402 = vadd.f32 %v1173, 1.0
        %v1403 = vadd.f32 %v1175, 1.0
        %v1404 = vadd.f32 %v1177, 1.0
        %v1405 = vadd.f32 %v1179, 1.0
        %v1406 = vadd.f32 %v1181, 1.0
        %v1407 = vadd.f32 %v1183, 1.0
        %v1408 = vadd.f32 %v1185, 1.0
        %v1409 = vadd.f32 %v1187, 1.0
        %v1410 = vadd.f32 %v1189, 1.0
        %v1411 = vadd.f32 %v1191, 1.0
        %v1412 = vadd.f32 %v1193, 1.0
        %v1413 = vadd.f32 %v1195, 1.0
        %v1414 = vadd.f32 %v1197, 1.0
        %v1415 = vadd.f32 %v1199, 1.0
        %v1416 = vadd.f32 %v1201, 1.0
        %v1417 = vadd.f32 %v1203, 1.0
        %v1418 = vadd.f32 %v1205, 1.0
        %v1419 = vadd.f32 %v1207, 1.0
        %v1420 = vadd.f32 %v1209, 1.0
        %v1421 = vadd.f32 %v1211, 1.0
        %v1422 = vadd.f32 %v1213, 1.0
        %v1423 = vadd.f32 %v1215, 1.0
        %v1424 = vadd.f32 %v1217, 1.0
        %v1425 = vadd.f32 %v1219, 1.0
        %v1426 = vadd.f32 %v1221, 1.0
        %v1427 = vadd.f32 %v1223, 1.0
        %v1428 = vadd.f32 %v1225, 1.0
        %v1429 = vadd.f32 %v1227, 1.0
        %v1430 = vadd.f32 %v1229, 1.0
        %v1431 = vadd.f32 %v1231, 1.0
        %v1432 = vadd.f32 %v1233, 1.0
        %v1433 = vadd.f32 %v1235, 1.0
        %v1434 = vadd.f32 %v1237, 1.0
        %v1435 = vadd.f32 %v1239, 1.0
        %v1436 = vadd.f32 %v1241, 1.0
        %v1437 = vadd.f32 %v1243, 1.0
        %v1438 = vadd.f32 %v1245, 1.0
        %v1439 = vadd.f32 %v1247, 1.0
        %v1440 = vadd.f32 %v1249, 1.0
        %v1441 = vadd.f32 %v1251, 1.0
        %v1442 = vadd.f32 %v1253, 1.0
        %v1443 = vadd.f32 %v1255, 1.0
        %v1444 = vadd.f32 %v1257, 1.0
        %v1445 = vadd.f32 %v1259, 1.0
        %v1446 = vadd.f32 %v1261, 1.0
        %v1447 = vadd.f32 %v1263, 1.0
        %v1448 = vadd.f32 %v1265, 1.0
        %v1449 = vadd.f32 %v1267, 1.0
        %v1450 = vadd.f32 %v1269, 1.0
        %v1451 = vadd.f32 %v1271, 1.0
        %v1452 = vadd.f32 %v1273, 1.0
        %v1453 = vadd.f32 %v1275, 1.0
        %v1454 = vadd.f32 %v1277, 1.0
        %v1455 = vadd.f32 %v1279, 1.0
        %v1456 = vadd.f32 %v1281, 1.0
        %v1457 = vadd.f32 %v1283, 1.0
        %v1458 = vadd.f32 %v1285, 1.0
        %v1459 = vadd.f32 %v1287, 1.0
        %v1460 = vadd.f32 %v1289, 1.0
        %v1461 = vadd.f32 %v1291, 1.0
        %v1462 = vadd.f32 %v1293, 1.0
        %v1463 = vadd.f32 %v1295, 1.0
        %v1464 = vadd.f32 %v1297, 1.0
        %v1465 = vadd.f32 %v1299, 1.0
        %v1466 = vadd.f32 %v1301, 1.0
        %v1467 = vadd.f32 %v1303, 1.0
        %v1468 = vadd.f32 %v1305, 1.0
        %v1469 = vadd.f32 %v1307, 1.0
        %v1470 = vadd.f32 %v1309, 1.0
        %v1471 = vadd.f32 %v1311, 1.0
        %v1472 = vadd.f32 %v1313, 1.0
        %v1473 = vadd.f32 %v1315, 1.0
        %v1474 = vadd.f32 %v1317, 1.0
        %v1475 = vadd.f32 %v1319, 1.0
        %v1476 = vadd.f32 %v1321, 1.0
        %v1477 = vadd.f32 %v1323, 1.0
        %v1478 = vadd.f32 %v1325, 1.0
        %v1479 = vadd.f32 %v1327, 1.0
        %v1480 = vadd.f32 %v1329, 1.0
        %v1481 = vadd.f32 %v1331, 1.0
        %v1482 = vadd.f32 %v1333, 1.0
        %v1483 = vadd.f32 %v1335, 1.0
        %v1484 = vadd.f32 %v1337, 1.0
        %v1485 = vadd.f32 %v1339, 1.0
        %v1486 = vadd.f32 %v1341, 1.0
        %v1487 = vadd.f32 %v1343, 1.0
        %v1488 = vadd.f32 %v1345, 1.0
        %v1489 = vadd.f32 %v1347, 1.0
        %v1490 = vadd.f32 %v1349, 1.0
        %v1491 = vadd.f32 %v1351, 1.0
        %v1492 = vadd.f32 %v1353, 1.0
        %v1493 = vadd.f32 %v1355, 1.0
        %v1494 = vadd.f32 %v1357, 1.0
        %v1495 = vadd.f32 %v1359, 1.0
        %v1496 = vadd.f32 %v1361, 1.0
        %v1497 = vadd.f32 %v1363, 1.0
        %v1498 = vadd.f32 %v1365, 1.0
        %v1499 = vadd.f32 %v1367, 1.0
        %v1500 = vadd.f32 %v1369, 1.0
        %v1501 = vadd.f32 %v1371, 1.0
        %v1502 = vadd.f32 %v1373, 1.0
        %v1503 = vadd.f32 %v1375, 1.0
        %v1504 = vrcp.pop %v1376
        %v1505 = vmul.f32 1.0, %v1504
        %v1506 = vrcp.pop %v1377
        %v1507 = vmul.f32 1.0, %v1506
        %v1508 = vrcp.pop %v1378
        %v1509 = vmul.f32 1.0, %v1508
        %v1510 = vrcp.pop %v1379
        %v1511 = vmul.f32 1.0, %v1510
        %v1512 = vrcp.pop %v1380
        %v1513 = vmul.f32 1.0, %v1512
        %v1514 = vrcp.pop %v1381
        %v1515 = vmul.f32 1.0, %v1514
        %v1516 = vrcp.pop %v1382
        %v1517 = vmul.f32 1.0, %v1516
        %v1518 = vrcp.pop %v1383
        %v1519 = vmul.f32 1.0, %v1518
        %v1520 = vrcp.pop %v1384
        %v1521 = vmul.f32 1.0, %v1520
        %v1522 = vrcp.pop %v1385
        %v1523 = vmul.f32 1.0, %v1522
        %v1524 = vrcp.pop %v1386
        %v1525 = vmul.f32 1.0, %v1524
        %v1526 = vrcp.pop %v1387
        %v1527 = vmul.f32 1.0, %v1526
        %v1528 = vrcp.pop %v1388
        %v1529 = vmul.f32 1.0, %v1528
        %v1530 = vrcp.pop %v1389
        %v1531 = vmul.f32 1.0, %v1530
        %v1532 = vrcp.pop %v1390
        %v1533 = vmul.f32 1.0, %v1532
        %v1534 = vrcp.pop %v1391
        %v1535 = vmul.f32 1.0, %v1534
        %v1536 = vrcp.pop %v1392
        %v1537 = vmul.f32 1.0, %v1536
        %v1538 = vrcp.pop %v1393
        %v1539 = vmul.f32 1.0, %v1538
        %v1540 = vrcp.pop %v1394
        %v1541 = vmul.f32 1.0, %v1540
        %v1542 = vrcp.pop %v1395
        %v1543 = vmul.f32 1.0, %v1542
        %v1544 = vrcp.pop %v1396
        %v1545 = vmul.f32 1.0, %v1544
        %v1546 = vrcp.pop %v1397
        %v1547 = vmul.f32 1.0, %v1546
        %v1548 = vrcp.pop %v1398
        %v1549 = vmul.f32 1.0, %v1548
        %v1550 = vrcp.pop %v1399
        %v1551 = vmul.f32 1.0, %v1550
        %v1552 = vrcp.pop %v1400
        %v1553 = vmul.f32 1.0, %v1552
        %v1554 = vrcp.pop %v1401
        %v1555 = vmul.f32 1.0, %v1554
        %v1556 = vrcp.pop %v1402
        %v1557 = vmul.f32 1.0, %v1556
        %v1558 = vrcp.pop %v1403
        %v1559 = vmul.f32 1.0, %v1558
        %v1560 = vrcp.pop %v1404
        %v1561 = vmul.f32 1.0, %v1560
        %v1562 = vrcp.pop %v1405
        %v1563 = vmul.f32 1.0, %v1562
        %v1564 = vrcp.pop %v1406
        %v1565 = vmul.f32 1.0, %v1564
        %v1566 = vrcp.pop %v1407
        %v1567 = vmul.f32 1.0, %v1566
        %v1568 = vrcp.pop %v1408
        %v1569 = vmul.f32 1.0, %v1568
        %v1570 = vrcp.pop %v1409
        %v1571 = vmul.f32 1.0, %v1570
        %v1572 = vrcp.pop %v1410
        %v1573 = vmul.f32 1.0, %v1572
        %v1574 = vrcp.pop %v1411
        %v1575 = vmul.f32 1.0, %v1574
        %v1576 = vrcp.pop %v1412
        %v1577 = vmul.f32 1.0, %v1576
        %v1578 = vrcp.pop %v1413
        %v1579 = vmul.f32 1.0, %v1578
        %v1580 = vrcp.pop %v1414
        %v1581 = vmul.f32 1.0, %v1580
        %v1582 = vrcp.pop %v1415
        %v1583 = vmul.f32 1.0, %v1582
        %v1584 = vrcp.pop %v1416
        %v1585 = vmul.f32 1.0, %v1584
        %v1586 = vrcp.pop %v1417
        %v1587 = vmul.f32 1.0, %v1586
        %v1588 = vrcp.pop %v1418
        %v1589 = vmul.f32 1.0, %v1588
        %v1590 = vrcp.pop %v1419
        %v1591 = vmul.f32 1.0, %v1590
        %v1592 = vrcp.pop %v1420
        %v1593 = vmul.f32 1.0, %v1592
        %v1594 = vrcp.pop %v1421
        %v1595 = vmul.f32 1.0, %v1594
        %v1596 = vrcp.pop %v1422
        %v1597 = vmul.f32 1.0, %v1596
        %v1598 = vrcp.pop %v1423
        %v1599 = vmul.f32 1.0, %v1598
        %v1600 = vrcp.pop %v1424
        %v1601 = vmul.f32 1.0, %v1600
        %v1602 = vrcp.pop %v1425
        %v1603 = vmul.f32 1.0, %v1602
        %v1604 = vrcp.pop %v1426
        %v1605 = vmul.f32 1.0, %v1604
        %v1606 = vrcp.pop %v1427
        %v1607 = vmul.f32 1.0, %v1606
        %v1608 = vrcp.pop %v1428
        %v1609 = vmul.f32 1.0, %v1608
        %v1610 = vrcp.pop %v1429
        %v1611 = vmul.f32 1.0, %v1610
        %v1612 = vrcp.pop %v1430
        %v1613 = vmul.f32 1.0, %v1612
        %v1614 = vrcp.pop %v1431
        %v1615 = vmul.f32 1.0, %v1614
        %v1616 = vrcp.pop %v1432
        %v1617 = vmul.f32 1.0, %v1616
        %v1618 = vrcp.pop %v1433
        %v1619 = vmul.f32 1.0, %v1618
        %v1620 = vrcp.pop %v1434
        %v1621 = vmul.f32 1.0, %v1620
        %v1622 = vrcp.pop %v1435
        %v1623 = vmul.f32 1.0, %v1622
        %v1624 = vrcp.pop %v1436
        %v1625 = vmul.f32 1.0, %v1624
        %v1626 = vrcp.pop %v1437
        %v1627 = vmul.f32 1.0, %v1626
        %v1628 = vrcp.pop %v1438
        %v1629 = vmul.f32 1.0, %v1628
        %v1630 = vrcp.pop %v1439
        %v1631 = vmul.f32 1.0, %v1630
        %v1632 = vrcp.pop %v1440
        %v1633 = vmul.f32 1.0, %v1632
        %v1634 = vrcp.pop %v1441
        %v1635 = vmul.f32 1.0, %v1634
        %v1636 = vrcp.pop %v1442
        %v1637 = vmul.f32 1.0, %v1636
        %v1638 = vrcp.pop %v1443
        %v1639 = vmul.f32 1.0, %v1638
        %v1640 = vrcp.pop %v1444
        %v1641 = vmul.f32 1.0, %v1640
        %v1642 = vrcp.pop %v1445
        %v1643 = vmul.f32 1.0, %v1642
        %v1644 = vrcp.pop %v1446
        %v1645 = vmul.f32 1.0, %v1644
        %v1646 = vrcp.pop %v1447
        %v1647 = vmul.f32 1.0, %v1646
        %v1648 = vrcp.pop %v1448
        %v1649 = vmul.f32 1.0, %v1648
        %v1650 = vrcp.pop %v1449
        %v1651 = vmul.f32 1.0, %v1650
        %v1652 = vrcp.pop %v1450
        %v1653 = vmul.f32 1.0, %v1652
        %v1654 = vrcp.pop %v1451
        %v1655 = vmul.f32 1.0, %v1654
        %v1656 = vrcp.pop %v1452
        %v1657 = vmul.f32 1.0, %v1656
        %v1658 = vrcp.pop %v1453
        %v1659 = vmul.f32 1.0, %v1658
        %v1660 = vrcp.pop %v1454
        %v1661 = vmul.f32 1.0, %v1660
        %v1662 = vrcp.pop %v1455
        %v1663 = vmul.f32 1.0, %v1662
        %v1664 = vrcp.pop %v1456
        %v1665 = vmul.f32 1.0, %v1664
        %v1666 = vrcp.pop %v1457
        %v1667 = vmul.f32 1.0, %v1666
        %v1668 = vrcp.pop %v1458
        %v1669 = vmul.f32 1.0, %v1668
        %v1670 = vrcp.pop %v1459
        %v1671 = vmul.f32 1.0, %v1670
        %v1672 = vrcp.pop %v1460
        %v1673 = vmul.f32 1.0, %v1672
        %v1674 = vrcp.pop %v1461
        %v1675 = vmul.f32 1.0, %v1674
        %v1676 = vrcp.pop %v1462
        %v1677 = vmul.f32 1.0, %v1676
        %v1678 = vrcp.pop %v1463
        %v1679 = vmul.f32 1.0, %v1678
        %v1680 = vrcp.pop %v1464
        %v1681 = vmul.f32 1.0, %v1680
        %v1682 = vrcp.pop %v1465
        %v1683 = vmul.f32 1.0, %v1682
        %v1684 = vrcp.pop %v1466
        %v1685 = vmul.f32 1.0, %v1684
        %v1686 = vrcp.pop %v1467
        %v1687 = vmul.f32 1.0, %v1686
        %v1688 = vrcp.pop %v1468
        %v1689 = vmul.f32 1.0, %v1688
        %v1690 = vrcp.pop %v1469
        %v1691 = vmul.f32 1.0, %v1690
        %v1692 = vrcp.pop %v1470
        %v1693 = vmul.f32 1.0, %v1692
        %v1694 = vrcp.pop %v1471
        %v1695 = vmul.f32 1.0, %v1694
        %v1696 = vrcp.pop %v1472
        %v1697 = vmul.f32 1.0, %v1696
        %v1698 = vrcp.pop %v1473
        %v1699 = vmul.f32 1.0, %v1698
        %v1700 = vrcp.pop %v1474
        %v1701 = vmul.f32 1.0, %v1700
        %v1702 = vrcp.pop %v1475
        %v1703 = vmul.f32 1.0, %v1702
        %v1704 = vrcp.pop %v1476
        %v1705 = vmul.f32 1.0, %v1704
        %v1706 = vrcp.pop %v1477
        %v1707 = vmul.f32 1.0, %v1706
        %v1708 = vrcp.pop %v1478
        %v1709 = vmul.f32 1.0, %v1708
        %v1710 = vrcp.pop %v1479
        %v1711 = vmul.f32 1.0, %v1710
        %v1712 = vrcp.pop %v1480
        %v1713 = vmul.f32 1.0, %v1712
        %v1714 = vrcp.pop %v1481
        %v1715 = vmul.f32 1.0, %v1714
        %v1716 = vrcp.pop %v1482
        %v1717 = vmul.f32 1.0, %v1716
        %v1718 = vrcp.pop %v1483
        %v1719 = vmul.f32 1.0, %v1718
        %v1720 = vrcp.pop %v1484
        %v1721 = vmul.f32 1.0, %v1720
        %v1722 = vrcp.pop %v1485
        %v1723 = vmul.f32 1.0, %v1722
        %v1724 = vrcp.pop %v1486
        %v1725 = vmul.f32 1.0, %v1724
        %v1726 = vrcp.pop %v1487
        %v1727 = vmul.f32 1.0, %v1726
        %v1728 = vrcp.pop %v1488
        %v1729 = vmul.f32 1.0, %v1728
        %v1730 = vrcp.pop %v1489
        %v1731 = vmul.f32 1.0, %v1730
        %v1732 = vrcp.pop %v1490
        %v1733 = vmul.f32 1.0, %v1732
        %v1734 = vrcp.pop %v1491
        %v1735 = vmul.f32 1.0, %v1734
        %v1736 = vrcp.pop %v1492
        %v1737 = vmul.f32 1.0, %v1736
        %v1738 = vrcp.pop %v1493
        %v1739 = vmul.f32 1.0, %v1738
        %v1740 = vrcp.pop %v1494
        %v1741 = vmul.f32 1.0, %v1740
        %v1742 = vrcp.pop %v1495
        %v1743 = vmul.f32 1.0, %v1742
        %v1744 = vrcp.pop %v1496
        %v1745 = vmul.f32 1.0, %v1744
        %v1746 = vrcp.pop %v1497
        %v1747 = vmul.f32 1.0, %v1746
        %v1748 = vrcp.pop %v1498
        %v1749 = vmul.f32 1.0, %v1748
        %v1750 = vrcp.pop %v1499
        %v1751 = vmul.f32 1.0, %v1750
        %v1752 = vrcp.pop %v1500
        %v1753 = vmul.f32 1.0, %v1752
        %v1754 = vrcp.pop %v1501
        %v1755 = vmul.f32 1.0, %v1754
        %v1756 = vrcp.pop %v1502
        %v1757 = vmul.f32 1.0, %v1756
        %v1758 = vrcp.pop %v1503
        %v1759 = vmul.f32 1.0, %v1758
        %v1760 = vmul.f32 %v674, %v1505
        %v1761 = vmul.f32 %v676, %v1507
        %v1762 = vmul.f32 %v678, %v1509
        %v1763 = vmul.f32 %v680, %v1511
        %v1764 = vmul.f32 %v684, %v1513
        %v1765 = vmul.f32 %v686, %v1515
        %v1766 = vmul.f32 %v688, %v1517
        %v1767 = vmul.f32 %v690, %v1519
        %v1768 = vmul.f32 %v694, %v1521
        %v1769 = vmul.f32 %v696, %v1523
        %v1770 = vmul.f32 %v698, %v1525
        %v1771 = vmul.f32 %v700, %v1527
        %v1772 = vmul.f32 %v704, %v1529
        %v1773 = vmul.f32 %v706, %v1531
        %v1774 = vmul.f32 %v708, %v1533
        %v1775 = vmul.f32 %v710, %v1535
        %v1776 = vmul.f32 %v714, %v1537
        %v1777 = vmul.f32 %v716, %v1539
        %v1778 = vmul.f32 %v718, %v1541
        %v1779 = vmul.f32 %v720, %v1543
        %v1780 = vmul.f32 %v724, %v1545
        %v1781 = vmul.f32 %v726, %v1547
        %v1782 = vmul.f32 %v728, %v1549
        %v1783 = vmul.f32 %v730, %v1551
        %v1784 = vmul.f32 %v734, %v1553
        %v1785 = vmul.f32 %v736, %v1555
        %v1786 = vmul.f32 %v738, %v1557
        %v1787 = vmul.f32 %v740, %v1559
        %v1788 = vmul.f32 %v744, %v1561
        %v1789 = vmul.f32 %v746, %v1563
        %v1790 = vmul.f32 %v748, %v1565
        %v1791 = vmul.f32 %v750, %v1567
        %v1792 = vmul.f32 %v754, %v1569
        %v1793 = vmul.f32 %v756, %v1571
        %v1794 = vmul.f32 %v758, %v1573
        %v1795 = vmul.f32 %v760, %v1575
        %v1796 = vmul.f32 %v764, %v1577
        %v1797 = vmul.f32 %v766, %v1579
        %v1798 = vmul.f32 %v768, %v1581
        %v1799 = vmul.f32 %v770, %v1583
        %v1800 = vmul.f32 %v774, %v1585
        %v1801 = vmul.f32 %v776, %v1587
        %v1802 = vmul.f32 %v778, %v1589
        %v1803 = vmul.f32 %v780, %v1591
        %v1804 = vmul.f32 %v784, %v1593
        %v1805 = vmul.f32 %v786, %v1595
        %v1806 = vmul.f32 %v788, %v1597
        %v1807 = vmul.f32 %v790, %v1599
        %v1808 = vmul.f32 %v794, %v1601
        %v1809 = vmul.f32 %v796, %v1603
        %v1810 = vmul.f32 %v798, %v1605
        %v1811 = vmul.f32 %v800, %v1607
        %v1812 = vmul.f32 %v804, %v1609
        %v1813 = vmul.f32 %v806, %v1611
        %v1814 = vmul.f32 %v808, %v1613
        %v1815 = vmul.f32 %v810, %v1615
        %v1816 = vmul.f32 %v814, %v1617
        %v1817 = vmul.f32 %v816, %v1619
        %v1818 = vmul.f32 %v818, %v1621
        %v1819 = vmul.f32 %v820, %v1623
        %v1820 = vmul.f32 %v824, %v1625
        %v1821 = vmul.f32 %v826, %v1627
        %v1822 = vmul.f32 %v828, %v1629
        %v1823 = vmul.f32 %v830, %v1631
        %v1824 = vmul.f32 %v834, %v1633
        %v1825 = vmul.f32 %v836, %v1635
        %v1826 = vmul.f32 %v838, %v1637
        %v1827 = vmul.f32 %v840, %v1639
        %v1828 = vmul.f32 %v844, %v1641
        %v1829 = vmul.f32 %v846, %v1643
        %v1830 = vmul.f32 %v848, %v1645
        %v1831 = vmul.f32 %v850, %v1647
        %v1832 = vmul.f32 %v854, %v1649
        %v1833 = vmul.f32 %v856, %v1651
        %v1834 = vmul.f32 %v858, %v1653
        %v1835 = vmul.f32 %v860, %v1655
        %v1836 = vmul.f32 %v864, %v1657
        %v1837 = vmul.f32 %v866, %v1659
        %v1838 = vmul.f32 %v868, %v1661
        %v1839 = vmul.f32 %v870, %v1663
        %v1840 = vmul.f32 %v874, %v1665
        %v1841 = vmul.f32 %v876, %v1667
        %v1842 = vmul.f32 %v878, %v1669
        %v1843 = vmul.f32 %v880, %v1671
        %v1844 = vmul.f32 %v884, %v1673
        %v1845 = vmul.f32 %v886, %v1675
        %v1846 = vmul.f32 %v888, %v1677
        %v1847 = vmul.f32 %v890, %v1679
        %v1848 = vmul.f32 %v894, %v1681
        %v1849 = vmul.f32 %v896, %v1683
        %v1850 = vmul.f32 %v898, %v1685
        %v1851 = vmul.f32 %v900, %v1687
        %v1852 = vmul.f32 %v904, %v1689
        %v1853 = vmul.f32 %v906, %v1691
        %v1854 = vmul.f32 %v908, %v1693
        %v1855 = vmul.f32 %v910, %v1695
        %v1856 = vmul.f32 %v914, %v1697
        %v1857 = vmul.f32 %v916, %v1699
        %v1858 = vmul.f32 %v918, %v1701
        %v1859 = vmul.f32 %v920, %v1703
        %v1860 = vmul.f32 %v924, %v1705
        %v1861 = vmul.f32 %v926, %v1707
        %v1862 = vmul.f32 %v928, %v1709
        %v1863 = vmul.f32 %v930, %v1711
        %v1864 = vmul.f32 %v934, %v1713
        %v1865 = vmul.f32 %v936, %v1715
        %v1866 = vmul.f32 %v938, %v1717
        %v1867 = vmul.f32 %v940, %v1719
        %v1868 = vmul.f32 %v944, %v1721
        %v1869 = vmul.f32 %v946, %v1723
        %v1870 = vmul.f32 %v948, %v1725
        %v1871 = vmul.f32 %v950, %v1727
        %v1872 = vmul.f32 %v954, %v1729
        %v1873 = vmul.f32 %v956, %v1731
        %v1874 = vmul.f32 %v958, %v1733
        %v1875 = vmul.f32 %v960, %v1735
        %v1876 = vmul.f32 %v964, %v1737
        %v1877 = vmul.f32 %v966, %v1739
        %v1878 = vmul.f32 %v968, %v1741
        %v1879 = vmul.f32 %v970, %v1743
        %v1880 = vmul.f32 %v974, %v1745
        %v1881 = vmul.f32 %v976, %v1747
        %v1882 = vmul.f32 %v978, %v1749
        %v1883 = vmul.f32 %v980, %v1751
        %v1884 = vmul.f32 %v984, %v1753
        %v1885 = vmul.f32 %v986, %v1755
        %v1886 = vmul.f32 %v988, %v1757
        %v1887 = vmul.f32 %v990, %v1759
        %v1888 = vpack.c.bf16 %v1762, %v1760
        %v1889 = vpack.c.bf16 %v1763, %v1761
        %v1890 = vpack.c.bf16 %v1766, %v1764
        %v1891 = vpack.c.bf16 %v1767, %v1765
        %v1892 = vpack.c.bf16 %v1770, %v1768
        %v1893 = vpack.c.bf16 %v1771, %v1769
        %v1894 = vpack.c.bf16 %v1774, %v1772
        %v1895 = vpack.c.bf16 %v1775, %v1773
        %v1896 = vpack.c.bf16 %v1778, %v1776
        %v1897 = vpack.c.bf16 %v1779, %v1777
        %v1898 = vpack.c.bf16 %v1782, %v1780
        %v1899 = vpack.c.bf16 %v1783, %v1781
        %v1900 = vpack.c.bf16 %v1786, %v1784
        %v1901 = vpack.c.bf16 %v1787, %v1785
        %v1902 = vpack.c.bf16 %v1790, %v1788
        %v1903 = vpack.c.bf16 %v1791, %v1789
        %v1904 = vpack.c.bf16 %v1794, %v1792
        %v1905 = vpack.c.bf16 %v1795, %v1793
        %v1906 = vpack.c.bf16 %v1798, %v1796
        %v1907 = vpack.c.bf16 %v1799, %v1797
        %v1908 = vpack.c.bf16 %v1802, %v1800
        %v1909 = vpack.c.bf16 %v1803, %v1801
        %v1910 = vpack.c.bf16 %v1806, %v1804
        %v1911 = vpack.c.bf16 %v1807, %v1805
        %v1912 = vpack.c.bf16 %v1810, %v1808
        %v1913 = vpack.c.bf16 %v1811, %v1809
        %v1914 = vpack.c.bf16 %v1814, %v1812
        %v1915 = vpack.c.bf16 %v1815, %v1813
        %v1916 = vpack.c.bf16 %v1818, %v1816
        %v1917 = vpack.c.bf16 %v1819, %v1817
        %v1918 = vpack.c.bf16 %v1822, %v1820
        %v1919 = vpack.c.bf16 %v1823, %v1821
        %v1920 = vpack.c.bf16 %v1826, %v1824
        %v1921 = vpack.c.bf16 %v1827, %v1825
        %v1922 = vpack.c.bf16 %v1830, %v1828
        %v1923 = vpack.c.bf16 %v1831, %v1829
        %v1924 = vpack.c.bf16 %v1834, %v1832
        %v1925 = vpack.c.bf16 %v1835, %v1833
        %v1926 = vpack.c.bf16 %v1838, %v1836
        %v1927 = vpack.c.bf16 %v1839, %v1837
        %v1928 = vpack.c.bf16 %v1842, %v1840
        %v1929 = vpack.c.bf16 %v1843, %v1841
        %v1930 = vpack.c.bf16 %v1846, %v1844
        %v1931 = vpack.c.bf16 %v1847, %v1845
        %v1932 = vpack.c.bf16 %v1850, %v1848
        %v1933 = vpack.c.bf16 %v1851, %v1849
        %v1934 = vpack.c.bf16 %v1854, %v1852
        %v1935 = vpack.c.bf16 %v1855, %v1853
        %v1936 = vpack.c.bf16 %v1858, %v1856
        %v1937 = vpack.c.bf16 %v1859, %v1857
        %v1938 = vpack.c.bf16 %v1862, %v1860
        %v1939 = vpack.c.bf16 %v1863, %v1861
        %v1940 = vpack.c.bf16 %v1866, %v1864
        %v1941 = vpack.c.bf16 %v1867, %v1865
        %v1942 = vpack.c.bf16 %v1870, %v1868
        %v1943 = vpack.c.bf16 %v1871, %v1869
        %v1944 = vpack.c.bf16 %v1874, %v1872
        %v1945 = vpack.c.bf16 %v1875, %v1873
        %v1946 = vpack.c.bf16 %v1878, %v1876
        %v1947 = vpack.c.bf16 %v1879, %v1877
        %v1948 = vpack.c.bf16 %v1882, %v1880
        %v1949 = vpack.c.bf16 %v1883, %v1881
        %v1950 = vpack.c.bf16 %v1886, %v1884
        %v1951 = vpack.c.bf16 %v1887, %v1885
        %v1952 = vld [vmem:[%s3] sm:$0xf]
        %v1953 = vld [vmem:[%s3 + $0x4] sm:$0xf]
        %v1954 = vld [vmem:[%s3 + $0x8] sm:$0xf]
        %v1955 = vld [vmem:[%s3 + $0xc] sm:$0xf]
        %v1956 = vld [vmem:[%s3 + $0x10] sm:$0xf]
        %v1957 = vld [vmem:[%s3 + $0x14] sm:$0xf]
        %v1958 = vld [vmem:[%s3 + $0x18] sm:$0xf]
        %v1959 = vld [vmem:[%s3 + $0x1c] sm:$0xf]
        %v1960 = vld [vmem:[%s3 + $0x20] sm:$0xf]
        %v1961 = vld [vmem:[%s3 + $0x24] sm:$0xf]
        %v1962 = vld [vmem:[%s3 + $0x28] sm:$0xf]
        %v1963 = vld [vmem:[%s3 + $0x2c] sm:$0xf]
        %v1964 = vld [vmem:[%s3 + $0x30] sm:$0xf]
        %v1965 = vld [vmem:[%s3 + $0x34] sm:$0xf]
        %v1966 = vld [vmem:[%s3 + $0x38] sm:$0xf]
        %v1967 = vld [vmem:[%s3 + $0x3c] sm:$0xf]
        %v1968 = vld [vmem:[%s3 + $0x40] sm:$0xf]
        %v1969 = vld [vmem:[%s3 + $0x44] sm:$0xf]
        %v1970 = vld [vmem:[%s3 + $0x48] sm:$0xf]
        %v1971 = vld [vmem:[%s3 + $0x4c] sm:$0xf]
        %v1972 = vld [vmem:[%s3 + $0x50] sm:$0xf]
        %v1973 = vld [vmem:[%s3 + $0x54] sm:$0xf]
        %v1974 = vld [vmem:[%s3 + $0x58] sm:$0xf]
        %v1975 = vld [vmem:[%s3 + $0x5c] sm:$0xf]
        %v1976 = vld [vmem:[%s3 + $0x60] sm:$0xf]
        %v1977 = vld [vmem:[%s3 + $0x64] sm:$0xf]
        %v1978 = vld [vmem:[%s3 + $0x68] sm:$0xf]
        %v1979 = vld [vmem:[%s3 + $0x6c] sm:$0xf]
        %v1980 = vld [vmem:[%s3 + $0x70] sm:$0xf]
        %v1981 = vld [vmem:[%s3 + $0x74] sm:$0xf]
        %v1982 = vld [vmem:[%s3 + $0x78] sm:$0xf]
        %v1983 = vld [vmem:[%s3 + $0x7c] sm:$0xf]
        %v1984 = vld [vmem:[%s4] sm:$0x1]
        %v1986 = vlaneseq
        %v1987 = vshrl.u32 %v1986, 7
        %v1988 = vsub.s32 0, %v1987
        %v1989 = vrot.slane %v1984, %v1988
        %v2023 = vunpack.c.l.b16 %v1952
        %v2024 = vunpack.c.l.b16 %v1953
        %v2025 = vunpack.c.l.b16 %v1954
        %v2026 = vunpack.c.l.b16 %v1955
        %v2027 = vunpack.c.l.b16 %v1956
        %v2028 = vunpack.c.l.b16 %v1957
        %v2029 = vunpack.c.l.b16 %v1958
        %v2030 = vunpack.c.l.b16 %v1959
        %v2031 = vunpack.c.l.b16 %v1960
        %v2032 = vunpack.c.l.b16 %v1961
        %v2033 = vunpack.c.l.b16 %v1962
        %v2034 = vunpack.c.l.b16 %v1963
        %v2035 = vunpack.c.l.b16 %v1964
        %v2036 = vunpack.c.l.b16 %v1965
        %v2037 = vunpack.c.l.b16 %v1966
        %v2038 = vunpack.c.l.b16 %v1967
        %v2039 = vunpack.c.l.b16 %v1968
        %v2040 = vunpack.c.l.b16 %v1969
        %v2041 = vunpack.c.l.b16 %v1970
        %v2042 = vunpack.c.l.b16 %v1971
        %v2043 = vunpack.c.l.b16 %v1972
        %v2044 = vunpack.c.l.b16 %v1973
        %v2045 = vunpack.c.l.b16 %v1974
        %v2046 = vunpack.c.l.b16 %v1975
        %v2047 = vunpack.c.l.b16 %v1976
        %v2048 = vunpack.c.l.b16 %v1977
        %v2049 = vunpack.c.l.b16 %v1978
        %v2050 = vunpack.c.l.b16 %v1979
        %v2051 = vunpack.c.l.b16 %v1980
        %v2052 = vunpack.c.l.b16 %v1981
        %v2053 = vunpack.c.l.b16 %v1982
        %v2054 = vunpack.c.l.b16 %v1983
        %v2055 = vpack.c.b16 %v2024, %v2023
        %v2056 = vpack.c.b16 %v2026, %v2025
        %v2057 = vpack.c.b16 %v2028, %v2027
        %v2058 = vpack.c.b16 %v2030, %v2029
        %v2059 = vpack.c.b16 %v2032, %v2031
        %v2060 = vpack.c.b16 %v2034, %v2033
        %v2061 = vpack.c.b16 %v2036, %v2035
        %v2062 = vpack.c.b16 %v2038, %v2037
        %v2063 = vpack.c.b16 %v2040, %v2039
        %v2064 = vpack.c.b16 %v2042, %v2041
        %v2065 = vpack.c.b16 %v2044, %v2043
        %v2066 = vpack.c.b16 %v2046, %v2045
        %v2067 = vpack.c.b16 %v2048, %v2047
        %v2068 = vpack.c.b16 %v2050, %v2049
        %v2069 = vpack.c.b16 %v2052, %v2051
        %v2070 = vpack.c.b16 %v2054, %v2053
        %2087 = vmatprep.subr.bf16.mxu0 0
        %2088 = vmatpush1.bf16.msra.mxu0 %v2062
        %2089 = vmatprep.subr.bf16.mxu0 0
        %2090 = vmatpush1.bf16.msra.mxu0 %v2061
        %2091 = vmatprep.subr.bf16.mxu0 0
        %2092 = vmatpush1.bf16.msra.mxu0 %v2060
        %2093 = vmatprep.subr.bf16.mxu0 0
        %2094 = vmatpush1.bf16.msra.mxu0 %v2059
        %2095 = vmatprep.subr.bf16.mxu0 0
        %2096 = vmatpush1.bf16.msra.mxu0 %v2058
        %2097 = vmatprep.subr.bf16.mxu0 0
        %2098 = vmatpush1.bf16.msra.mxu0 %v2057
        %2099 = vmatprep.subr.bf16.mxu0 0
        %2100 = vmatpush1.bf16.msra.mxu0 %v2056
        %2101 = vmatprep.subr.bf16.mxu0 0
        %2102 = vmatpush1.bf16.msra.mxu0 %v2055
        %2103 = vmatprep.subr.bf16.mxu0 0
        %2104 = vmatpush2.bf16.msra.mxu0 %v2070
        %2105 = vmatprep.subr.bf16.mxu0 0
        %2106 = vmatpush2.bf16.msra.mxu0 %v2069
        %2107 = vmatprep.subr.bf16.mxu0 0
        %2108 = vmatpush2.bf16.msra.mxu0 %v2068
        %2109 = vmatprep.subr.bf16.mxu0 0
        %2110 = vmatpush2.bf16.msra.mxu0 %v2067
        %2111 = vmatprep.subr.bf16.mxu0 0
        %2112 = vmatpush2.bf16.msra.mxu0 %v2066
        %2113 = vmatprep.subr.bf16.mxu0 0
        %2114 = vmatpush2.bf16.msra.mxu0 %v2065
        %2115 = vmatprep.subr.bf16.mxu0 0
        %2116 = vmatpush2.bf16.msra.mxu0 %v2064
        %2117 = vmatprep.subr.bf16.mxu0 0
        %2118 = vmatpush2.bf16.msra.mxu0 %v2063
        %2119 = vmatprep.mubr.bf16.mxu0 %v1889
        %2120 = vmatmul.mubr.bf16.gmra.mxu0 %v1888
        %v2121 = vpop.f32.mrf.mxu0
        %v2122 = vadd.f32 %v1989, %v2121
        %v2123 = vpop.f32.mrf.mxu0
        %v2124 = vpop.f32.mrf.mxu0
        %v2125 = vadd.f32 %v1989, %v2124
        %v2126 = vpop.f32.mrf.mxu0
        %2127 = vmatprep.mubr.bf16.mxu0 %v1891
        %2128 = vmatmul.mubr.bf16.gmra.mxu0 %v1890
        %v2129 = vpop.f32.mrf.mxu0
        %v2130 = vadd.f32 %v1989, %v2129
        %v2131 = vpop.f32.mrf.mxu0
        %v2132 = vpop.f32.mrf.mxu0
        %v2133 = vadd.f32 %v1989, %v2132
        %v2134 = vpop.f32.mrf.mxu0
        %2135 = vmatprep.mubr.bf16.mxu0 %v1893
        %2136 = vmatmul.mubr.bf16.gmra.mxu0 %v1892
        %v2137 = vpop.f32.mrf.mxu0
        %v2138 = vadd.f32 %v1989, %v2137
        %v2139 = vpop.f32.mrf.mxu0
        %v2140 = vpop.f32.mrf.mxu0
        %v2141 = vadd.f32 %v1989, %v2140
        %v2142 = vpop.f32.mrf.mxu0
        %2143 = vmatprep.mubr.bf16.mxu0 %v1895
        %2144 = vmatmul.mubr.bf16.gmra.mxu0 %v1894
        %v2145 = vpop.f32.mrf.mxu0
        %v2146 = vadd.f32 %v1989, %v2145
        %v2147 = vpop.f32.mrf.mxu0
        %v2148 = vpop.f32.mrf.mxu0
        %v2149 = vadd.f32 %v1989, %v2148
        %v2150 = vpop.f32.mrf.mxu0
        %2151 = vmatprep.mubr.bf16.mxu0 %v1897
        %2152 = vmatmul.mubr.bf16.gmra.mxu0 %v1896
        %v2153 = vpop.f32.mrf.mxu0
        %v2154 = vadd.f32 %v1989, %v2153
        %v2155 = vpop.f32.mrf.mxu0
        %v2156 = vpop.f32.mrf.mxu0
        %v2157 = vadd.f32 %v1989, %v2156
        %v2158 = vpop.f32.mrf.mxu0
        %2159 = vmatprep.mubr.bf16.mxu0 %v1899
        %2160 = vmatmul.mubr.bf16.gmra.mxu0 %v1898
        %v2161 = vpop.f32.mrf.mxu0
        %v2162 = vadd.f32 %v1989, %v2161
        %v2163 = vpop.f32.mrf.mxu0
        %v2164 = vpop.f32.mrf.mxu0
        %v2165 = vadd.f32 %v1989, %v2164
        %v2166 = vpop.f32.mrf.mxu0
        %2167 = vmatprep.mubr.bf16.mxu0 %v1901
        %2168 = vmatmul.mubr.bf16.gmra.mxu0 %v1900
        %v2169 = vpop.f32.mrf.mxu0
        %v2170 = vadd.f32 %v1989, %v2169
        %v2171 = vpop.f32.mrf.mxu0
        %v2172 = vpop.f32.mrf.mxu0
        %v2173 = vadd.f32 %v1989, %v2172
        %v2174 = vpop.f32.mrf.mxu0
        %2175 = vmatprep.mubr.bf16.mxu0 %v1903
        %2176 = vmatmul.mubr.bf16.gmra.mxu0 %v1902
        %v2177 = vpop.f32.mrf.mxu0
        %v2178 = vadd.f32 %v1989, %v2177
        %v2179 = vpop.f32.mrf.mxu0
        %v2180 = vpop.f32.mrf.mxu0
        %v2181 = vadd.f32 %v1989, %v2180
        %v2182 = vpop.f32.mrf.mxu0
        %2183 = vmatprep.mubr.bf16.mxu0 %v1905
        %2184 = vmatmul.mubr.bf16.gmra.mxu0 %v1904
        %v2185 = vpop.f32.mrf.mxu0
        %v2186 = vadd.f32 %v1989, %v2185
        %v2187 = vpop.f32.mrf.mxu0
        %v2188 = vpop.f32.mrf.mxu0
        %v2189 = vadd.f32 %v1989, %v2188
        %v2190 = vpop.f32.mrf.mxu0
        %2191 = vmatprep.mubr.bf16.mxu0 %v1907
        %2192 = vmatmul.mubr.bf16.gmra.mxu0 %v1906
        %v2193 = vpop.f32.mrf.mxu0
        %v2194 = vadd.f32 %v1989, %v2193
        %v2195 = vpop.f32.mrf.mxu0
        %v2196 = vpop.f32.mrf.mxu0
        %v2197 = vadd.f32 %v1989, %v2196
        %v2198 = vpop.f32.mrf.mxu0
        %2199 = vmatprep.mubr.bf16.mxu0 %v1909
        %2200 = vmatmul.mubr.bf16.gmra.mxu0 %v1908
        %v2201 = vpop.f32.mrf.mxu0
        %v2202 = vadd.f32 %v1989, %v2201
        %v2203 = vpop.f32.mrf.mxu0
        %v2204 = vpop.f32.mrf.mxu0
        %v2205 = vadd.f32 %v1989, %v2204
        %v2206 = vpop.f32.mrf.mxu0
        %2207 = vmatprep.mubr.bf16.mxu0 %v1911
        %2208 = vmatmul.mubr.bf16.gmra.mxu0 %v1910
        %v2209 = vpop.f32.mrf.mxu0
        %v2210 = vadd.f32 %v1989, %v2209
        %v2211 = vpop.f32.mrf.mxu0
        %v2212 = vpop.f32.mrf.mxu0
        %v2213 = vadd.f32 %v1989, %v2212
        %v2214 = vpop.f32.mrf.mxu0
        %2215 = vmatprep.mubr.bf16.mxu0 %v1913
        %2216 = vmatmul.mubr.bf16.gmra.mxu0 %v1912
        %v2217 = vpop.f32.mrf.mxu0
        %v2218 = vadd.f32 %v1989, %v2217
        %v2219 = vpop.f32.mrf.mxu0
        %v2220 = vpop.f32.mrf.mxu0
        %v2221 = vadd.f32 %v1989, %v2220
        %v2222 = vpop.f32.mrf.mxu0
        %2223 = vmatprep.mubr.bf16.mxu0 %v1915
        %2224 = vmatmul.mubr.bf16.gmra.mxu0 %v1914
        %v2225 = vpop.f32.mrf.mxu0
        %v2226 = vadd.f32 %v1989, %v2225
        %v2227 = vpop.f32.mrf.mxu0
        %v2228 = vpop.f32.mrf.mxu0
        %v2229 = vadd.f32 %v1989, %v2228
        %v2230 = vpop.f32.mrf.mxu0
        %2231 = vmatprep.mubr.bf16.mxu0 %v1917
        %2232 = vmatmul.mubr.bf16.gmra.mxu0 %v1916
        %v2233 = vpop.f32.mrf.mxu0
        %v2234 = vadd.f32 %v1989, %v2233
        %v2235 = vpop.f32.mrf.mxu0
        %v2236 = vpop.f32.mrf.mxu0
        %v2237 = vadd.f32 %v1989, %v2236
        %v2238 = vpop.f32.mrf.mxu0
        %2239 = vmatprep.mubr.bf16.mxu0 %v1919
        %2240 = vmatmul.mubr.bf16.gmra.mxu0 %v1918
        %v2241 = vpop.f32.mrf.mxu0
        %v2242 = vadd.f32 %v1989, %v2241
        %v2243 = vpop.f32.mrf.mxu0
        %v2244 = vpop.f32.mrf.mxu0
        %v2245 = vadd.f32 %v1989, %v2244
        %v2246 = vpop.f32.mrf.mxu0
        %2247 = vmatprep.mubr.bf16.mxu0 %v1921
        %2248 = vmatmul.mubr.bf16.gmra.mxu0 %v1920
        %v2249 = vpop.f32.mrf.mxu0
        %v2250 = vadd.f32 %v1989, %v2249
        %v2251 = vpop.f32.mrf.mxu0
        %v2252 = vpop.f32.mrf.mxu0
        %v2253 = vadd.f32 %v1989, %v2252
        %v2254 = vpop.f32.mrf.mxu0
        %2255 = vmatprep.mubr.bf16.mxu0 %v1923
        %2256 = vmatmul.mubr.bf16.gmra.mxu0 %v1922
        %v2257 = vpop.f32.mrf.mxu0
        %v2258 = vadd.f32 %v1989, %v2257
        %v2259 = vpop.f32.mrf.mxu0
        %v2260 = vpop.f32.mrf.mxu0
        %v2261 = vadd.f32 %v1989, %v2260
        %v2262 = vpop.f32.mrf.mxu0
        %2263 = vmatprep.mubr.bf16.mxu0 %v1925
        %2264 = vmatmul.mubr.bf16.gmra.mxu0 %v1924
        %v2265 = vpop.f32.mrf.mxu0
        %v2266 = vadd.f32 %v1989, %v2265
        %v2267 = vpop.f32.mrf.mxu0
        %v2268 = vpop.f32.mrf.mxu0
        %v2269 = vadd.f32 %v1989, %v2268
        %v2270 = vpop.f32.mrf.mxu0
        %2271 = vmatprep.mubr.bf16.mxu0 %v1927
        %2272 = vmatmul.mubr.bf16.gmra.mxu0 %v1926
        %v2273 = vpop.f32.mrf.mxu0
        %v2274 = vadd.f32 %v1989, %v2273
        %v2275 = vpop.f32.mrf.mxu0
        %v2276 = vpop.f32.mrf.mxu0
        %v2277 = vadd.f32 %v1989, %v2276
        %v2278 = vpop.f32.mrf.mxu0
        %2279 = vmatprep.mubr.bf16.mxu0 %v1929
        %2280 = vmatmul.mubr.bf16.gmra.mxu0 %v1928
        %v2281 = vpop.f32.mrf.mxu0
        %v2282 = vadd.f32 %v1989, %v2281
        %v2283 = vpop.f32.mrf.mxu0
        %v2284 = vpop.f32.mrf.mxu0
        %v2285 = vadd.f32 %v1989, %v2284
        %v2286 = vpop.f32.mrf.mxu0
        %2287 = vmatprep.mubr.bf16.mxu0 %v1931
        %2288 = vmatmul.mubr.bf16.gmra.mxu0 %v1930
        %v2289 = vpop.f32.mrf.mxu0
        %v2290 = vadd.f32 %v1989, %v2289
        %v2291 = vpop.f32.mrf.mxu0
        %v2292 = vpop.f32.mrf.mxu0
        %v2293 = vadd.f32 %v1989, %v2292
        %v2294 = vpop.f32.mrf.mxu0
        %2295 = vmatprep.mubr.bf16.mxu0 %v1933
        %2296 = vmatmul.mubr.bf16.gmra.mxu0 %v1932
        %v2297 = vpop.f32.mrf.mxu0
        %v2298 = vadd.f32 %v1989, %v2297
        %v2299 = vpop.f32.mrf.mxu0
        %v2300 = vpop.f32.mrf.mxu0
        %v2301 = vadd.f32 %v1989, %v2300
        %v2302 = vpop.f32.mrf.mxu0
        %2303 = vmatprep.mubr.bf16.mxu0 %v1935
        %2304 = vmatmul.mubr.bf16.gmra.mxu0 %v1934
        %v2305 = vpop.f32.mrf.mxu0
        %v2306 = vadd.f32 %v1989, %v2305
        %v2307 = vpop.f32.mrf.mxu0
        %v2308 = vpop.f32.mrf.mxu0
        %v2309 = vadd.f32 %v1989, %v2308
        %v2310 = vpop.f32.mrf.mxu0
        %2311 = vmatprep.mubr.bf16.mxu0 %v1937
        %2312 = vmatmul.mubr.bf16.gmra.mxu0 %v1936
        %v2313 = vpop.f32.mrf.mxu0
        %v2314 = vadd.f32 %v1989, %v2313
        %v2315 = vpop.f32.mrf.mxu0
        %v2316 = vpop.f32.mrf.mxu0
        %v2317 = vadd.f32 %v1989, %v2316
        %v2318 = vpop.f32.mrf.mxu0
        %2319 = vmatprep.mubr.bf16.mxu0 %v1939
        %2320 = vmatmul.mubr.bf16.gmra.mxu0 %v1938
        %v2321 = vpop.f32.mrf.mxu0
        %v2322 = vadd.f32 %v1989, %v2321
        %v2323 = vpop.f32.mrf.mxu0
        %v2324 = vpop.f32.mrf.mxu0
        %v2325 = vadd.f32 %v1989, %v2324
        %v2326 = vpop.f32.mrf.mxu0
        %2327 = vmatprep.mubr.bf16.mxu0 %v1941
        %2328 = vmatmul.mubr.bf16.gmra.mxu0 %v1940
        %v2329 = vpop.f32.mrf.mxu0
        %v2330 = vadd.f32 %v1989, %v2329
        %v2331 = vpop.f32.mrf.mxu0
        %v2332 = vpop.f32.mrf.mxu0
        %v2333 = vadd.f32 %v1989, %v2332
        %v2334 = vpop.f32.mrf.mxu0
        %2335 = vmatprep.mubr.bf16.mxu0 %v1943
        %2336 = vmatmul.mubr.bf16.gmra.mxu0 %v1942
        %v2337 = vpop.f32.mrf.mxu0
        %v2338 = vadd.f32 %v1989, %v2337
        %v2339 = vpop.f32.mrf.mxu0
        %v2340 = vpop.f32.mrf.mxu0
        %v2341 = vadd.f32 %v1989, %v2340
        %v2342 = vpop.f32.mrf.mxu0
        %2343 = vmatprep.mubr.bf16.mxu0 %v1945
        %2344 = vmatmul.mubr.bf16.gmra.mxu0 %v1944
        %v2345 = vpop.f32.mrf.mxu0
        %v2346 = vadd.f32 %v1989, %v2345
        %v2347 = vpop.f32.mrf.mxu0
        %v2348 = vpop.f32.mrf.mxu0
        %v2349 = vadd.f32 %v1989, %v2348
        %v2350 = vpop.f32.mrf.mxu0
        %2351 = vmatprep.mubr.bf16.mxu0 %v1947
        %2352 = vmatmul.mubr.bf16.gmra.mxu0 %v1946
        %v2353 = vpop.f32.mrf.mxu0
        %v2354 = vadd.f32 %v1989, %v2353
        %v2355 = vpop.f32.mrf.mxu0
        %v2356 = vpop.f32.mrf.mxu0
        %v2357 = vadd.f32 %v1989, %v2356
        %v2358 = vpop.f32.mrf.mxu0
        %2359 = vmatprep.mubr.bf16.mxu0 %v1949
        %2360 = vmatmul.mubr.bf16.gmra.mxu0 %v1948
        %v2361 = vpop.f32.mrf.mxu0
        %v2362 = vadd.f32 %v1989, %v2361
        %v2363 = vpop.f32.mrf.mxu0
        %v2364 = vpop.f32.mrf.mxu0
        %v2365 = vadd.f32 %v1989, %v2364
        %v2366 = vpop.f32.mrf.mxu0
        %2367 = vmatprep.mubr.bf16.mxu0 %v1951
        %2368 = vmatmul.mubr.bf16.gmra.mxu0 %v1950
        %v2369 = vpop.f32.mrf.mxu0
        %v2370 = vadd.f32 %v1989, %v2369
        %v2371 = vpop.f32.mrf.mxu0
        %v2372 = vpop.f32.mrf.mxu0
        %v2373 = vadd.f32 %v1989, %v2372
        %v2374 = vpop.f32.mrf.mxu0
        %2375 = vdwg.mxu0
        %v2376 = vxor.u32 %v2122, 2147483648
        %v2377 = vxor.u32 %v2125, 2147483648
        %v2378 = vxor.u32 %v2130, 2147483648
        %v2379 = vxor.u32 %v2133, 2147483648
        %v2380 = vxor.u32 %v2138, 2147483648
        %v2381 = vxor.u32 %v2141, 2147483648
        %v2382 = vxor.u32 %v2146, 2147483648
        %v2383 = vxor.u32 %v2149, 2147483648
        %v2384 = vxor.u32 %v2154, 2147483648
        %v2385 = vxor.u32 %v2157, 2147483648
        %v2386 = vxor.u32 %v2162, 2147483648
        %v2387 = vxor.u32 %v2165, 2147483648
        %v2388 = vxor.u32 %v2170, 2147483648
        %v2389 = vxor.u32 %v2173, 2147483648
        %v2390 = vxor.u32 %v2178, 2147483648
        %v2391 = vxor.u32 %v2181, 2147483648
        %v2392 = vxor.u32 %v2186, 2147483648
        %v2393 = vxor.u32 %v2189, 2147483648
        %v2394 = vxor.u32 %v2194, 2147483648
        %v2395 = vxor.u32 %v2197, 2147483648
        %v2396 = vxor.u32 %v2202, 2147483648
        %v2397 = vxor.u32 %v2205, 2147483648
        %v2398 = vxor.u32 %v2210, 2147483648
        %v2399 = vxor.u32 %v2213, 2147483648
        %v2400 = vxor.u32 %v2218, 2147483648
        %v2401 = vxor.u32 %v2221, 2147483648
        %v2402 = vxor.u32 %v2226, 2147483648
        %v2403 = vxor.u32 %v2229, 2147483648
        %v2404 = vxor.u32 %v2234, 2147483648
        %v2405 = vxor.u32 %v2237, 2147483648
        %v2406 = vxor.u32 %v2242, 2147483648
        %v2407 = vxor.u32 %v2245, 2147483648
        %v2408 = vxor.u32 %v2250, 2147483648
        %v2409 = vxor.u32 %v2253, 2147483648
        %v2410 = vxor.u32 %v2258, 2147483648
        %v2411 = vxor.u32 %v2261, 2147483648
        %v2412 = vxor.u32 %v2266, 2147483648
        %v2413 = vxor.u32 %v2269, 2147483648
        %v2414 = vxor.u32 %v2274, 2147483648
        %v2415 = vxor.u32 %v2277, 2147483648
        %v2416 = vxor.u32 %v2282, 2147483648
        %v2417 = vxor.u32 %v2285, 2147483648
        %v2418 = vxor.u32 %v2290, 2147483648
        %v2419 = vxor.u32 %v2293, 2147483648
        %v2420 = vxor.u32 %v2298, 2147483648
        %v2421 = vxor.u32 %v2301, 2147483648
        %v2422 = vxor.u32 %v2306, 2147483648
        %v2423 = vxor.u32 %v2309, 2147483648
        %v2424 = vxor.u32 %v2314, 2147483648
        %v2425 = vxor.u32 %v2317, 2147483648
        %v2426 = vxor.u32 %v2322, 2147483648
        %v2427 = vxor.u32 %v2325, 2147483648
        %v2428 = vxor.u32 %v2330, 2147483648
        %v2429 = vxor.u32 %v2333, 2147483648
        %v2430 = vxor.u32 %v2338, 2147483648
        %v2431 = vxor.u32 %v2341, 2147483648
        %v2432 = vxor.u32 %v2346, 2147483648
        %v2433 = vxor.u32 %v2349, 2147483648
        %v2434 = vxor.u32 %v2354, 2147483648
        %v2435 = vxor.u32 %v2357, 2147483648
        %v2436 = vxor.u32 %v2362, 2147483648
        %v2437 = vxor.u32 %v2365, 2147483648
        %v2438 = vxor.u32 %v2370, 2147483648
        %v2439 = vxor.u32 %v2373, 2147483648
        %v2440 = vmul.f32 %v2376, 1.442695
        %v2441 = vpow.pop %v2440
        %v2442 = vmul.f32 %v2377, 1.442695
        %v2443 = vpow.pop %v2442
        %v2444 = vmul.f32 %v2378, 1.442695
        %v2445 = vpow.pop %v2444
        %v2446 = vmul.f32 %v2379, 1.442695
        %v2447 = vpow.pop %v2446
        %v2448 = vmul.f32 %v2380, 1.442695
        %v2449 = vpow.pop %v2448
        %v2450 = vmul.f32 %v2381, 1.442695
        %v2451 = vpow.pop %v2450
        %v2452 = vmul.f32 %v2382, 1.442695
        %v2453 = vpow.pop %v2452
        %v2454 = vmul.f32 %v2383, 1.442695
        %v2455 = vpow.pop %v2454
        %v2456 = vmul.f32 %v2384, 1.442695
        %v2457 = vpow.pop %v2456
        %v2458 = vmul.f32 %v2385, 1.442695
        %v2459 = vpow.pop %v2458
        %v2460 = vmul.f32 %v2386, 1.442695
        %v2461 = vpow.pop %v2460
        %v2462 = vmul.f32 %v2387, 1.442695
        %v2463 = vpow.pop %v2462
        %v2464 = vmul.f32 %v2388, 1.442695
        %v2465 = vpow.pop %v2464
        %v2466 = vmul.f32 %v2389, 1.442695
        %v2467 = vpow.pop %v2466
        %v2468 = vmul.f32 %v2390, 1.442695
        %v2469 = vpow.pop %v2468
        %v2470 = vmul.f32 %v2391, 1.442695
        %v2471 = vpow.pop %v2470
        %v2472 = vmul.f32 %v2392, 1.442695
        %v2473 = vpow.pop %v2472
        %v2474 = vmul.f32 %v2393, 1.442695
        %v2475 = vpow.pop %v2474
        %v2476 = vmul.f32 %v2394, 1.442695
        %v2477 = vpow.pop %v2476
        %v2478 = vmul.f32 %v2395, 1.442695
        %v2479 = vpow.pop %v2478
        %v2480 = vmul.f32 %v2396, 1.442695
        %v2481 = vpow.pop %v2480
        %v2482 = vmul.f32 %v2397, 1.442695
        %v2483 = vpow.pop %v2482
        %v2484 = vmul.f32 %v2398, 1.442695
        %v2485 = vpow.pop %v2484
        %v2486 = vmul.f32 %v2399, 1.442695
        %v2487 = vpow.pop %v2486
        %v2488 = vmul.f32 %v2400, 1.442695
        %v2489 = vpow.pop %v2488
        %v2490 = vmul.f32 %v2401, 1.442695
        %v2491 = vpow.pop %v2490
        %v2492 = vmul.f32 %v2402, 1.442695
        %v2493 = vpow.pop %v2492
        %v2494 = vmul.f32 %v2403, 1.442695
        %v2495 = vpow.pop %v2494
        %v2496 = vmul.f32 %v2404, 1.442695
        %v2497 = vpow.pop %v2496
        %v2498 = vmul.f32 %v2405, 1.442695
        %v2499 = vpow.pop %v2498
        %v2500 = vmul.f32 %v2406, 1.442695
        %v2501 = vpow.pop %v2500
        %v2502 = vmul.f32 %v2407, 1.442695
        %v2503 = vpow.pop %v2502
        %v2504 = vmul.f32 %v2408, 1.442695
        %v2505 = vpow.pop %v2504
        %v2506 = vmul.f32 %v2409, 1.442695
        %v2507 = vpow.pop %v2506
        %v2508 = vmul.f32 %v2410, 1.442695
        %v2509 = vpow.pop %v2508
        %v2510 = vmul.f32 %v2411, 1.442695
        %v2511 = vpow.pop %v2510
        %v2512 = vmul.f32 %v2412, 1.442695
        %v2513 = vpow.pop %v2512
        %v2514 = vmul.f32 %v2413, 1.442695
        %v2515 = vpow.pop %v2514
        %v2516 = vmul.f32 %v2414, 1.442695
        %v2517 = vpow.pop %v2516
        %v2518 = vmul.f32 %v2415, 1.442695
        %v2519 = vpow.pop %v2518
        %v2520 = vmul.f32 %v2416, 1.442695
        %v2521 = vpow.pop %v2520
        %v2522 = vmul.f32 %v2417, 1.442695
        %v2523 = vpow.pop %v2522
        %v2524 = vmul.f32 %v2418, 1.442695
        %v2525 = vpow.pop %v2524
        %v2526 = vmul.f32 %v2419, 1.442695
        %v2527 = vpow.pop %v2526
        %v2528 = vmul.f32 %v2420, 1.442695
        %v2529 = vpow.pop %v2528
        %v2530 = vmul.f32 %v2421, 1.442695
        %v2531 = vpow.pop %v2530
        %v2532 = vmul.f32 %v2422, 1.442695
        %v2533 = vpow.pop %v2532
        %v2534 = vmul.f32 %v2423, 1.442695
        %v2535 = vpow.pop %v2534
        %v2536 = vmul.f32 %v2424, 1.442695
        %v2537 = vpow.pop %v2536
        %v2538 = vmul.f32 %v2425, 1.442695
        %v2539 = vpow.pop %v2538
        %v2540 = vmul.f32 %v2426, 1.442695
        %v2541 = vpow.pop %v2540
        %v2542 = vmul.f32 %v2427, 1.442695
        %v2543 = vpow.pop %v2542
        %v2544 = vmul.f32 %v2428, 1.442695
        %v2545 = vpow.pop %v2544
        %v2546 = vmul.f32 %v2429, 1.442695
        %v2547 = vpow.pop %v2546
        %v2548 = vmul.f32 %v2430, 1.442695
        %v2549 = vpow.pop %v2548
        %v2550 = vmul.f32 %v2431, 1.442695
        %v2551 = vpow.pop %v2550
        %v2552 = vmul.f32 %v2432, 1.442695
        %v2553 = vpow.pop %v2552
        %v2554 = vmul.f32 %v2433, 1.442695
        %v2555 = vpow.pop %v2554
        %v2556 = vmul.f32 %v2434, 1.442695
        %v2557 = vpow.pop %v2556
        %v2558 = vmul.f32 %v2435, 1.442695
        %v2559 = vpow.pop %v2558
        %v2560 = vmul.f32 %v2436, 1.442695
        %v2561 = vpow.pop %v2560
        %v2562 = vmul.f32 %v2437, 1.442695
        %v2563 = vpow.pop %v2562
        %v2564 = vmul.f32 %v2438, 1.442695
        %v2565 = vpow.pop %v2564
        %v2566 = vmul.f32 %v2439, 1.442695
        %v2567 = vpow.pop %v2566
        %v2568 = vadd.f32 %v2441, 1.0
        %v2569 = vadd.f32 %v2443, 1.0
        %v2570 = vadd.f32 %v2445, 1.0
        %v2571 = vadd.f32 %v2447, 1.0
        %v2572 = vadd.f32 %v2449, 1.0
        %v2573 = vadd.f32 %v2451, 1.0
        %v2574 = vadd.f32 %v2453, 1.0
        %v2575 = vadd.f32 %v2455, 1.0
        %v2576 = vadd.f32 %v2457, 1.0
        %v2577 = vadd.f32 %v2459, 1.0
        %v2578 = vadd.f32 %v2461, 1.0
        %v2579 = vadd.f32 %v2463, 1.0
        %v2580 = vadd.f32 %v2465, 1.0
        %v2581 = vadd.f32 %v2467, 1.0
        %v2582 = vadd.f32 %v2469, 1.0
        %v2583 = vadd.f32 %v2471, 1.0
        %v2584 = vadd.f32 %v2473, 1.0
        %v2585 = vadd.f32 %v2475, 1.0
        %v2586 = vadd.f32 %v2477, 1.0
        %v2587 = vadd.f32 %v2479, 1.0
        %v2588 = vadd.f32 %v2481, 1.0
        %v2589 = vadd.f32 %v2483, 1.0
        %v2590 = vadd.f32 %v2485, 1.0
        %v2591 = vadd.f32 %v2487, 1.0
        %v2592 = vadd.f32 %v2489, 1.0
        %v2593 = vadd.f32 %v2491, 1.0
        %v2594 = vadd.f32 %v2493, 1.0
        %v2595 = vadd.f32 %v2495, 1.0
        %v2596 = vadd.f32 %v2497, 1.0
        %v2597 = vadd.f32 %v2499, 1.0
        %v2598 = vadd.f32 %v2501, 1.0
        %v2599 = vadd.f32 %v2503, 1.0
        %v2600 = vadd.f32 %v2505, 1.0
        %v2601 = vadd.f32 %v2507, 1.0
        %v2602 = vadd.f32 %v2509, 1.0
        %v2603 = vadd.f32 %v2511, 1.0
        %v2604 = vadd.f32 %v2513, 1.0
        %v2605 = vadd.f32 %v2515, 1.0
        %v2606 = vadd.f32 %v2517, 1.0
        %v2607 = vadd.f32 %v2519, 1.0
        %v2608 = vadd.f32 %v2521, 1.0
        %v2609 = vadd.f32 %v2523, 1.0
        %v2610 = vadd.f32 %v2525, 1.0
        %v2611 = vadd.f32 %v2527, 1.0
        %v2612 = vadd.f32 %v2529, 1.0
        %v2613 = vadd.f32 %v2531, 1.0
        %v2614 = vadd.f32 %v2533, 1.0
        %v2615 = vadd.f32 %v2535, 1.0
        %v2616 = vadd.f32 %v2537, 1.0
        %v2617 = vadd.f32 %v2539, 1.0
        %v2618 = vadd.f32 %v2541, 1.0
        %v2619 = vadd.f32 %v2543, 1.0
        %v2620 = vadd.f32 %v2545, 1.0
        %v2621 = vadd.f32 %v2547, 1.0
        %v2622 = vadd.f32 %v2549, 1.0
        %v2623 = vadd.f32 %v2551, 1.0
        %v2624 = vadd.f32 %v2553, 1.0
        %v2625 = vadd.f32 %v2555, 1.0
        %v2626 = vadd.f32 %v2557, 1.0
        %v2627 = vadd.f32 %v2559, 1.0
        %v2628 = vadd.f32 %v2561, 1.0
        %v2629 = vadd.f32 %v2563, 1.0
        %v2630 = vadd.f32 %v2565, 1.0
        %v2631 = vadd.f32 %v2567, 1.0
        %v2632 = vrcp.pop %v2568
        %v2633 = vmul.f32 1.0, %v2632
        %v2634 = vrcp.pop %v2569
        %v2635 = vmul.f32 1.0, %v2634
        %v2636 = vrcp.pop %v2570
        %v2637 = vmul.f32 1.0, %v2636
        %v2638 = vrcp.pop %v2571
        %v2639 = vmul.f32 1.0, %v2638
        %v2640 = vrcp.pop %v2572
        %v2641 = vmul.f32 1.0, %v2640
        %v2642 = vrcp.pop %v2573
        %v2643 = vmul.f32 1.0, %v2642
        %v2644 = vrcp.pop %v2574
        %v2645 = vmul.f32 1.0, %v2644
        %v2646 = vrcp.pop %v2575
        %v2647 = vmul.f32 1.0, %v2646
        %v2648 = vrcp.pop %v2576
        %v2649 = vmul.f32 1.0, %v2648
        %v2650 = vrcp.pop %v2577
        %v2651 = vmul.f32 1.0, %v2650
        %v2652 = vrcp.pop %v2578
        %v2653 = vmul.f32 1.0, %v2652
        %v2654 = vrcp.pop %v2579
        %v2655 = vmul.f32 1.0, %v2654
        %v2656 = vrcp.pop %v2580
        %v2657 = vmul.f32 1.0, %v2656
        %v2658 = vrcp.pop %v2581
        %v2659 = vmul.f32 1.0, %v2658
        %v2660 = vrcp.pop %v2582
        %v2661 = vmul.f32 1.0, %v2660
        %v2662 = vrcp.pop %v2583
        %v2663 = vmul.f32 1.0, %v2662
        %v2664 = vrcp.pop %v2584
        %v2665 = vmul.f32 1.0, %v2664
        %v2666 = vrcp.pop %v2585
        %v2667 = vmul.f32 1.0, %v2666
        %v2668 = vrcp.pop %v2586
        %v2669 = vmul.f32 1.0, %v2668
        %v2670 = vrcp.pop %v2587
        %v2671 = vmul.f32 1.0, %v2670
        %v2672 = vrcp.pop %v2588
        %v2673 = vmul.f32 1.0, %v2672
        %v2674 = vrcp.pop %v2589
        %v2675 = vmul.f32 1.0, %v2674
        %v2676 = vrcp.pop %v2590
        %v2677 = vmul.f32 1.0, %v2676
        %v2678 = vrcp.pop %v2591
        %v2679 = vmul.f32 1.0, %v2678
        %v2680 = vrcp.pop %v2592
        %v2681 = vmul.f32 1.0, %v2680
        %v2682 = vrcp.pop %v2593
        %v2683 = vmul.f32 1.0, %v2682
        %v2684 = vrcp.pop %v2594
        %v2685 = vmul.f32 1.0, %v2684
        %v2686 = vrcp.pop %v2595
        %v2687 = vmul.f32 1.0, %v2686
        %v2688 = vrcp.pop %v2596
        %v2689 = vmul.f32 1.0, %v2688
        %v2690 = vrcp.pop %v2597
        %v2691 = vmul.f32 1.0, %v2690
        %v2692 = vrcp.pop %v2598
        %v2693 = vmul.f32 1.0, %v2692
        %v2694 = vrcp.pop %v2599
        %v2695 = vmul.f32 1.0, %v2694
        %v2696 = vrcp.pop %v2600
        %v2697 = vmul.f32 1.0, %v2696
        %v2698 = vrcp.pop %v2601
        %v2699 = vmul.f32 1.0, %v2698
        %v2700 = vrcp.pop %v2602
        %v2701 = vmul.f32 1.0, %v2700
        %v2702 = vrcp.pop %v2603
        %v2703 = vmul.f32 1.0, %v2702
        %v2704 = vrcp.pop %v2604
        %v2705 = vmul.f32 1.0, %v2704
        %v2706 = vrcp.pop %v2605
        %v2707 = vmul.f32 1.0, %v2706
        %v2708 = vrcp.pop %v2606
        %v2709 = vmul.f32 1.0, %v2708
        %v2710 = vrcp.pop %v2607
        %v2711 = vmul.f32 1.0, %v2710
        %v2712 = vrcp.pop %v2608
        %v2713 = vmul.f32 1.0, %v2712
        %v2714 = vrcp.pop %v2609
        %v2715 = vmul.f32 1.0, %v2714
        %v2716 = vrcp.pop %v2610
        %v2717 = vmul.f32 1.0, %v2716
        %v2718 = vrcp.pop %v2611
        %v2719 = vmul.f32 1.0, %v2718
        %v2720 = vrcp.pop %v2612
        %v2721 = vmul.f32 1.0, %v2720
        %v2722 = vrcp.pop %v2613
        %v2723 = vmul.f32 1.0, %v2722
        %v2724 = vrcp.pop %v2614
        %v2725 = vmul.f32 1.0, %v2724
        %v2726 = vrcp.pop %v2615
        %v2727 = vmul.f32 1.0, %v2726
        %v2728 = vrcp.pop %v2616
        %v2729 = vmul.f32 1.0, %v2728
        %v2730 = vrcp.pop %v2617
        %v2731 = vmul.f32 1.0, %v2730
        %v2732 = vrcp.pop %v2618
        %v2733 = vmul.f32 1.0, %v2732
        %v2734 = vrcp.pop %v2619
        %v2735 = vmul.f32 1.0, %v2734
        %v2736 = vrcp.pop %v2620
        %v2737 = vmul.f32 1.0, %v2736
        %v2738 = vrcp.pop %v2621
        %v2739 = vmul.f32 1.0, %v2738
        %v2740 = vrcp.pop %v2622
        %v2741 = vmul.f32 1.0, %v2740
        %v2742 = vrcp.pop %v2623
        %v2743 = vmul.f32 1.0, %v2742
        %v2744 = vrcp.pop %v2624
        %v2745 = vmul.f32 1.0, %v2744
        %v2746 = vrcp.pop %v2625
        %v2747 = vmul.f32 1.0, %v2746
        %v2748 = vrcp.pop %v2626
        %v2749 = vmul.f32 1.0, %v2748
        %v2750 = vrcp.pop %v2627
        %v2751 = vmul.f32 1.0, %v2750
        %v2752 = vrcp.pop %v2628
        %v2753 = vmul.f32 1.0, %v2752
        %v2754 = vrcp.pop %v2629
        %v2755 = vmul.f32 1.0, %v2754
        %v2756 = vrcp.pop %v2630
        %v2757 = vmul.f32 1.0, %v2756
        %v2758 = vrcp.pop %v2631
        %v2759 = vmul.f32 1.0, %v2758
        %v2760 = vmul.f32 %v2122, %v2633
        %v2761 = vmul.f32 %v2125, %v2635
        %v2762 = vmul.f32 %v2130, %v2637
        %v2763 = vmul.f32 %v2133, %v2639
        %v2764 = vmul.f32 %v2138, %v2641
        %v2765 = vmul.f32 %v2141, %v2643
        %v2766 = vmul.f32 %v2146, %v2645
        %v2767 = vmul.f32 %v2149, %v2647
        %v2768 = vmul.f32 %v2154, %v2649
        %v2769 = vmul.f32 %v2157, %v2651
        %v2770 = vmul.f32 %v2162, %v2653
        %v2771 = vmul.f32 %v2165, %v2655
        %v2772 = vmul.f32 %v2170, %v2657
        %v2773 = vmul.f32 %v2173, %v2659
        %v2774 = vmul.f32 %v2178, %v2661
        %v2775 = vmul.f32 %v2181, %v2663
        %v2776 = vmul.f32 %v2186, %v2665
        %v2777 = vmul.f32 %v2189, %v2667
        %v2778 = vmul.f32 %v2194, %v2669
        %v2779 = vmul.f32 %v2197, %v2671
        %v2780 = vmul.f32 %v2202, %v2673
        %v2781 = vmul.f32 %v2205, %v2675
        %v2782 = vmul.f32 %v2210, %v2677
        %v2783 = vmul.f32 %v2213, %v2679
        %v2784 = vmul.f32 %v2218, %v2681
        %v2785 = vmul.f32 %v2221, %v2683
        %v2786 = vmul.f32 %v2226, %v2685
        %v2787 = vmul.f32 %v2229, %v2687
        %v2788 = vmul.f32 %v2234, %v2689
        %v2789 = vmul.f32 %v2237, %v2691
        %v2790 = vmul.f32 %v2242, %v2693
        %v2791 = vmul.f32 %v2245, %v2695
        %v2792 = vmul.f32 %v2250, %v2697
        %v2793 = vmul.f32 %v2253, %v2699
        %v2794 = vmul.f32 %v2258, %v2701
        %v2795 = vmul.f32 %v2261, %v2703
        %v2796 = vmul.f32 %v2266, %v2705
        %v2797 = vmul.f32 %v2269, %v2707
        %v2798 = vmul.f32 %v2274, %v2709
        %v2799 = vmul.f32 %v2277, %v2711
        %v2800 = vmul.f32 %v2282, %v2713
        %v2801 = vmul.f32 %v2285, %v2715
        %v2802 = vmul.f32 %v2290, %v2717
        %v2803 = vmul.f32 %v2293, %v2719
        %v2804 = vmul.f32 %v2298, %v2721
        %v2805 = vmul.f32 %v2301, %v2723
        %v2806 = vmul.f32 %v2306, %v2725
        %v2807 = vmul.f32 %v2309, %v2727
        %v2808 = vmul.f32 %v2314, %v2729
        %v2809 = vmul.f32 %v2317, %v2731
        %v2810 = vmul.f32 %v2322, %v2733
        %v2811 = vmul.f32 %v2325, %v2735
        %v2812 = vmul.f32 %v2330, %v2737
        %v2813 = vmul.f32 %v2333, %v2739
        %v2814 = vmul.f32 %v2338, %v2741
        %v2815 = vmul.f32 %v2341, %v2743
        %v2816 = vmul.f32 %v2346, %v2745
        %v2817 = vmul.f32 %v2349, %v2747
        %v2818 = vmul.f32 %v2354, %v2749
        %v2819 = vmul.f32 %v2357, %v2751
        %v2820 = vmul.f32 %v2362, %v2753
        %v2821 = vmul.f32 %v2365, %v2755
        %v2822 = vmul.f32 %v2370, %v2757
        %v2823 = vmul.f32 %v2373, %v2759
        %v2824 = vpack.c.bf16 %v2761, %v2760
        %v2825 = vpack.c.bf16 %v2763, %v2762
        %v2826 = vpack.c.bf16 %v2765, %v2764
        %v2827 = vpack.c.bf16 %v2767, %v2766
        %v2828 = vpack.c.bf16 %v2769, %v2768
        %v2829 = vpack.c.bf16 %v2771, %v2770
        %v2830 = vpack.c.bf16 %v2773, %v2772
        %v2831 = vpack.c.bf16 %v2775, %v2774
        %v2832 = vpack.c.bf16 %v2777, %v2776
        %v2833 = vpack.c.bf16 %v2779, %v2778
        %v2834 = vpack.c.bf16 %v2781, %v2780
        %v2835 = vpack.c.bf16 %v2783, %v2782
        %v2836 = vpack.c.bf16 %v2785, %v2784
        %v2837 = vpack.c.bf16 %v2787, %v2786
        %v2838 = vpack.c.bf16 %v2789, %v2788
        %v2839 = vpack.c.bf16 %v2791, %v2790
        %v2840 = vpack.c.bf16 %v2793, %v2792
        %v2841 = vpack.c.bf16 %v2795, %v2794
        %v2842 = vpack.c.bf16 %v2797, %v2796
        %v2843 = vpack.c.bf16 %v2799, %v2798
        %v2844 = vpack.c.bf16 %v2801, %v2800
        %v2845 = vpack.c.bf16 %v2803, %v2802
        %v2846 = vpack.c.bf16 %v2805, %v2804
        %v2847 = vpack.c.bf16 %v2807, %v2806
        %v2848 = vpack.c.bf16 %v2809, %v2808
        %v2849 = vpack.c.bf16 %v2811, %v2810
        %v2850 = vpack.c.bf16 %v2813, %v2812
        %v2851 = vpack.c.bf16 %v2815, %v2814
        %v2852 = vpack.c.bf16 %v2817, %v2816
        %v2853 = vpack.c.bf16 %v2819, %v2818
        %v2854 = vpack.c.bf16 %v2821, %v2820
        %v2855 = vpack.c.bf16 %v2823, %v2822
        %v2856 = vld [vmem:[%s5] sm:$0xf]
        %v2857 = vld [vmem:[%s5 + $0x4] sm:$0xf]
        %v2858 = vld [vmem:[%s5 + $0x8] sm:$0xf]
        %v2859 = vld [vmem:[%s5 + $0xc] sm:$0xf]
        %v2860 = vld [vmem:[%s5 + $0x10] sm:$0xf]
        %v2861 = vld [vmem:[%s5 + $0x14] sm:$0xf]
        %v2862 = vld [vmem:[%s5 + $0x18] sm:$0xf]
        %v2863 = vld [vmem:[%s5 + $0x1c] sm:$0xf]
        %v2864 = vld [vmem:[%s5 + $0x20] sm:$0xf]
        %v2865 = vld [vmem:[%s5 + $0x24] sm:$0xf]
        %v2866 = vld [vmem:[%s5 + $0x28] sm:$0xf]
        %v2867 = vld [vmem:[%s5 + $0x2c] sm:$0xf]
        %v2868 = vld [vmem:[%s5 + $0x30] sm:$0xf]
        %v2869 = vld [vmem:[%s5 + $0x34] sm:$0xf]
        %v2870 = vld [vmem:[%s5 + $0x38] sm:$0xf]
        %v2871 = vld [vmem:[%s5 + $0x3c] sm:$0xf]
        %v2872 = vld [vmem:[%s6] sm:$0x1]
        %v2874 = vlaneseq
        %v2875 = vshrl.u32 %v2874, 7
        %v2876 = vsub.s32 0, %v2875
        %v2877 = vrot.slane %v2872, %v2876
        %v2895 = vunpack.c.l.b16 %v2856
        %v2896 = vunpack.c.l.b16 %v2857
        %v2897 = vunpack.c.l.b16 %v2858
        %v2898 = vunpack.c.l.b16 %v2859
        %v2899 = vunpack.c.l.b16 %v2860
        %v2900 = vunpack.c.l.b16 %v2861
        %v2901 = vunpack.c.l.b16 %v2862
        %v2902 = vunpack.c.l.b16 %v2863
        %v2903 = vunpack.c.l.b16 %v2864
        %v2904 = vunpack.c.l.b16 %v2865
        %v2905 = vunpack.c.l.b16 %v2866
        %v2906 = vunpack.c.l.b16 %v2867
        %v2907 = vunpack.c.l.b16 %v2868
        %v2908 = vunpack.c.l.b16 %v2869
        %v2909 = vunpack.c.l.b16 %v2870
        %v2910 = vunpack.c.l.b16 %v2871
        %v2911 = vpack.c.b16 %v2896, %v2895
        %v2912 = vpack.c.b16 %v2898, %v2897
        %v2913 = vpack.c.b16 %v2900, %v2899
        %v2914 = vpack.c.b16 %v2902, %v2901
        %v2915 = vpack.c.b16 %v2904, %v2903
        %v2916 = vpack.c.b16 %v2906, %v2905
        %v2917 = vpack.c.b16 %v2908, %v2907
        %v2918 = vpack.c.b16 %v2910, %v2909
        %2927 = vmatprep.subr.bf16.mxu0 0
        %2928 = vmatpush1.bf16.msra.mxu0 %v2918
        %2929 = vmatprep.subr.bf16.mxu0 0
        %2930 = vmatpush1.bf16.msra.mxu0 %v2917
        %2931 = vmatprep.subr.bf16.mxu0 0
        %2932 = vmatpush1.bf16.msra.mxu0 %v2916
        %2933 = vmatprep.subr.bf16.mxu0 0
        %2934 = vmatpush1.bf16.msra.mxu0 %v2915
        %2935 = vmatprep.subr.bf16.mxu0 0
        %2936 = vmatpush1.bf16.msra.mxu0 %v2914
        %2937 = vmatprep.subr.bf16.mxu0 0
        %2938 = vmatpush1.bf16.msra.mxu0 %v2913
        %2939 = vmatprep.subr.bf16.mxu0 0
        %2940 = vmatpush1.bf16.msra.mxu0 %v2912
        %2941 = vmatprep.subr.bf16.mxu0 0
        %2942 = vmatpush1.bf16.msra.mxu0 %v2911
        %2943 = vmatprep.subr.bf16.mxu0 0
        %2944 = vmatpush2.bf16.msra.mxu0 0
        %2945 = vmatprep.subr.bf16.mxu0 0
        %2946 = vmatpush2.bf16.msra.mxu0 0
        %2947 = vmatprep.subr.bf16.mxu0 0
        %2948 = vmatpush2.bf16.msra.mxu0 0
        %2949 = vmatprep.subr.bf16.mxu0 0
        %2950 = vmatpush2.bf16.msra.mxu0 0
        %2951 = vmatprep.subr.bf16.mxu0 0
        %2952 = vmatpush2.bf16.msra.mxu0 0
        %2953 = vmatprep.subr.bf16.mxu0 0
        %2954 = vmatpush2.bf16.msra.mxu0 0
        %2955 = vmatprep.subr.bf16.mxu0 0
        %2956 = vmatpush2.bf16.msra.mxu0 0
        %2957 = vmatprep.subr.bf16.mxu0 0
        %2958 = vmatpush2.bf16.msra.mxu0 0
        %2959 = vmatprep.mubr.bf16.mxu0 0
        %2960 = vmatmul.mubr.bf16.gmra.mxu0 %v2824
        %v2961 = vpop.f32.mrf.mxu0
        %v2962 = vadd.f32 %v2877, %v2961
        %v2963 = vpop.f32.mrf.mxu0
        %v2964 = vpop.f32.mrf.mxu0
        %v2965 = vadd.f32 %v2877, %v2964
        %v2966 = vpop.f32.mrf.mxu0
        %2967 = vmatprep.mubr.bf16.mxu0 0
        %2968 = vmatmul.mubr.bf16.gmra.mxu0 %v2825
        %v2969 = vpop.f32.mrf.mxu0
        %v2970 = vadd.f32 %v2877, %v2969
        %v2971 = vpop.f32.mrf.mxu0
        %v2972 = vpop.f32.mrf.mxu0
        %v2973 = vadd.f32 %v2877, %v2972
        %v2974 = vpop.f32.mrf.mxu0
        %2975 = vmatprep.mubr.bf16.mxu0 0
        %2976 = vmatmul.mubr.bf16.gmra.mxu0 %v2826
        %v2977 = vpop.f32.mrf.mxu0
        %v2978 = vadd.f32 %v2877, %v2977
        %v2979 = vpop.f32.mrf.mxu0
        %v2980 = vpop.f32.mrf.mxu0
        %v2981 = vadd.f32 %v2877, %v2980
        %v2982 = vpop.f32.mrf.mxu0
        %2983 = vmatprep.mubr.bf16.mxu0 0
        %2984 = vmatmul.mubr.bf16.gmra.mxu0 %v2827
        %v2985 = vpop.f32.mrf.mxu0
        %v2986 = vadd.f32 %v2877, %v2985
        %v2987 = vpop.f32.mrf.mxu0
        %v2988 = vpop.f32.mrf.mxu0
        %v2989 = vadd.f32 %v2877, %v2988
        %v2990 = vpop.f32.mrf.mxu0
        %2991 = vmatprep.mubr.bf16.mxu0 0
        %2992 = vmatmul.mubr.bf16.gmra.mxu0 %v2828
        %v2993 = vpop.f32.mrf.mxu0
        %v2994 = vadd.f32 %v2877, %v2993
        %v2995 = vpop.f32.mrf.mxu0
        %v2996 = vpop.f32.mrf.mxu0
        %v2997 = vadd.f32 %v2877, %v2996
        %v2998 = vpop.f32.mrf.mxu0
        %2999 = vmatprep.mubr.bf16.mxu0 0
        %3000 = vmatmul.mubr.bf16.gmra.mxu0 %v2829
        %v3001 = vpop.f32.mrf.mxu0
        %v3002 = vadd.f32 %v2877, %v3001
        %v3003 = vpop.f32.mrf.mxu0
        %v3004 = vpop.f32.mrf.mxu0
        %v3005 = vadd.f32 %v2877, %v3004
        %v3006 = vpop.f32.mrf.mxu0
        %3007 = vmatprep.mubr.bf16.mxu0 0
        %3008 = vmatmul.mubr.bf16.gmra.mxu0 %v2830
        %v3009 = vpop.f32.mrf.mxu0
        %v3010 = vadd.f32 %v2877, %v3009
        %v3011 = vpop.f32.mrf.mxu0
        %v3012 = vpop.f32.mrf.mxu0
        %v3013 = vadd.f32 %v2877, %v3012
        %v3014 = vpop.f32.mrf.mxu0
        %3015 = vmatprep.mubr.bf16.mxu0 0
        %3016 = vmatmul.mubr.bf16.gmra.mxu0 %v2831
        %v3017 = vpop.f32.mrf.mxu0
        %v3018 = vadd.f32 %v2877, %v3017
        %v3019 = vpop.f32.mrf.mxu0
        %v3020 = vpop.f32.mrf.mxu0
        %v3021 = vadd.f32 %v2877, %v3020
        %v3022 = vpop.f32.mrf.mxu0
        %3023 = vmatprep.mubr.bf16.mxu0 0
        %3024 = vmatmul.mubr.bf16.gmra.mxu0 %v2832
        %v3025 = vpop.f32.mrf.mxu0
        %v3026 = vadd.f32 %v2877, %v3025
        %v3027 = vpop.f32.mrf.mxu0
        %v3028 = vpop.f32.mrf.mxu0
        %v3029 = vadd.f32 %v2877, %v3028
        %v3030 = vpop.f32.mrf.mxu0
        %3031 = vmatprep.mubr.bf16.mxu0 0
        %3032 = vmatmul.mubr.bf16.gmra.mxu0 %v2833
        %v3033 = vpop.f32.mrf.mxu0
        %v3034 = vadd.f32 %v2877, %v3033
        %v3035 = vpop.f32.mrf.mxu0
        %v3036 = vpop.f32.mrf.mxu0
        %v3037 = vadd.f32 %v2877, %v3036
        %v3038 = vpop.f32.mrf.mxu0
        %3039 = vmatprep.mubr.bf16.mxu0 0
        %3040 = vmatmul.mubr.bf16.gmra.mxu0 %v2834
        %v3041 = vpop.f32.mrf.mxu0
        %v3042 = vadd.f32 %v2877, %v3041
        %v3043 = vpop.f32.mrf.mxu0
        %v3044 = vpop.f32.mrf.mxu0
        %v3045 = vadd.f32 %v2877, %v3044
        %v3046 = vpop.f32.mrf.mxu0
        %3047 = vmatprep.mubr.bf16.mxu0 0
        %3048 = vmatmul.mubr.bf16.gmra.mxu0 %v2835
        %v3049 = vpop.f32.mrf.mxu0
        %v3050 = vadd.f32 %v2877, %v3049
        %v3051 = vpop.f32.mrf.mxu0
        %v3052 = vpop.f32.mrf.mxu0
        %v3053 = vadd.f32 %v2877, %v3052
        %v3054 = vpop.f32.mrf.mxu0
        %3055 = vmatprep.mubr.bf16.mxu0 0
        %3056 = vmatmul.mubr.bf16.gmra.mxu0 %v2836
        %v3057 = vpop.f32.mrf.mxu0
        %v3058 = vadd.f32 %v2877, %v3057
        %v3059 = vpop.f32.mrf.mxu0
        %v3060 = vpop.f32.mrf.mxu0
        %v3061 = vadd.f32 %v2877, %v3060
        %v3062 = vpop.f32.mrf.mxu0
        %3063 = vmatprep.mubr.bf16.mxu0 0
        %3064 = vmatmul.mubr.bf16.gmra.mxu0 %v2837
        %v3065 = vpop.f32.mrf.mxu0
        %v3066 = vadd.f32 %v2877, %v3065
        %v3067 = vpop.f32.mrf.mxu0
        %v3068 = vpop.f32.mrf.mxu0
        %v3069 = vadd.f32 %v2877, %v3068
        %v3070 = vpop.f32.mrf.mxu0
        %3071 = vmatprep.mubr.bf16.mxu0 0
        %3072 = vmatmul.mubr.bf16.gmra.mxu0 %v2838
        %v3073 = vpop.f32.mrf.mxu0
        %v3074 = vadd.f32 %v2877, %v3073
        %v3075 = vpop.f32.mrf.mxu0
        %v3076 = vpop.f32.mrf.mxu0
        %v3077 = vadd.f32 %v2877, %v3076
        %v3078 = vpop.f32.mrf.mxu0
        %3079 = vmatprep.mubr.bf16.mxu0 0
        %3080 = vmatmul.mubr.bf16.gmra.mxu0 %v2839
        %v3081 = vpop.f32.mrf.mxu0
        %v3082 = vadd.f32 %v2877, %v3081
        %v3083 = vpop.f32.mrf.mxu0
        %v3084 = vpop.f32.mrf.mxu0
        %v3085 = vadd.f32 %v2877, %v3084
        %v3086 = vpop.f32.mrf.mxu0
        %3087 = vmatprep.mubr.bf16.mxu0 0
        %3088 = vmatmul.mubr.bf16.gmra.mxu0 %v2840
        %v3089 = vpop.f32.mrf.mxu0
        %v3090 = vadd.f32 %v2877, %v3089
        %v3091 = vpop.f32.mrf.mxu0
        %v3092 = vpop.f32.mrf.mxu0
        %v3093 = vadd.f32 %v2877, %v3092
        %v3094 = vpop.f32.mrf.mxu0
        %3095 = vmatprep.mubr.bf16.mxu0 0
        %3096 = vmatmul.mubr.bf16.gmra.mxu0 %v2841
        %v3097 = vpop.f32.mrf.mxu0
        %v3098 = vadd.f32 %v2877, %v3097
        %v3099 = vpop.f32.mrf.mxu0
        %v3100 = vpop.f32.mrf.mxu0
        %v3101 = vadd.f32 %v2877, %v3100
        %v3102 = vpop.f32.mrf.mxu0
        %3103 = vmatprep.mubr.bf16.mxu0 0
        %3104 = vmatmul.mubr.bf16.gmra.mxu0 %v2842
        %v3105 = vpop.f32.mrf.mxu0
        %v3106 = vadd.f32 %v2877, %v3105
        %v3107 = vpop.f32.mrf.mxu0
        %v3108 = vpop.f32.mrf.mxu0
        %v3109 = vadd.f32 %v2877, %v3108
        %v3110 = vpop.f32.mrf.mxu0
        %3111 = vmatprep.mubr.bf16.mxu0 0
        %3112 = vmatmul.mubr.bf16.gmra.mxu0 %v2843
        %v3113 = vpop.f32.mrf.mxu0
        %v3114 = vadd.f32 %v2877, %v3113
        %v3115 = vpop.f32.mrf.mxu0
        %v3116 = vpop.f32.mrf.mxu0
        %v3117 = vadd.f32 %v2877, %v3116
        %v3118 = vpop.f32.mrf.mxu0
        %3119 = vmatprep.mubr.bf16.mxu0 0
        %3120 = vmatmul.mubr.bf16.gmra.mxu0 %v2844
        %v3121 = vpop.f32.mrf.mxu0
        %v3122 = vadd.f32 %v2877, %v3121
        %v3123 = vpop.f32.mrf.mxu0
        %v3124 = vpop.f32.mrf.mxu0
        %v3125 = vadd.f32 %v2877, %v3124
        %v3126 = vpop.f32.mrf.mxu0
        %3127 = vmatprep.mubr.bf16.mxu0 0
        %3128 = vmatmul.mubr.bf16.gmra.mxu0 %v2845
        %v3129 = vpop.f32.mrf.mxu0
        %v3130 = vadd.f32 %v2877, %v3129
        %v3131 = vpop.f32.mrf.mxu0
        %v3132 = vpop.f32.mrf.mxu0
        %v3133 = vadd.f32 %v2877, %v3132
        %v3134 = vpop.f32.mrf.mxu0
        %3135 = vmatprep.mubr.bf16.mxu0 0
        %3136 = vmatmul.mubr.bf16.gmra.mxu0 %v2846
        %v3137 = vpop.f32.mrf.mxu0
        %v3138 = vadd.f32 %v2877, %v3137
        %v3139 = vpop.f32.mrf.mxu0
        %v3140 = vpop.f32.mrf.mxu0
        %v3141 = vadd.f32 %v2877, %v3140
        %v3142 = vpop.f32.mrf.mxu0
        %3143 = vmatprep.mubr.bf16.mxu0 0
        %3144 = vmatmul.mubr.bf16.gmra.mxu0 %v2847
        %v3145 = vpop.f32.mrf.mxu0
        %v3146 = vadd.f32 %v2877, %v3145
        %v3147 = vpop.f32.mrf.mxu0
        %v3148 = vpop.f32.mrf.mxu0
        %v3149 = vadd.f32 %v2877, %v3148
        %v3150 = vpop.f32.mrf.mxu0
        %3151 = vmatprep.mubr.bf16.mxu0 0
        %3152 = vmatmul.mubr.bf16.gmra.mxu0 %v2848
        %v3153 = vpop.f32.mrf.mxu0
        %v3154 = vadd.f32 %v2877, %v3153
        %v3155 = vpop.f32.mrf.mxu0
        %v3156 = vpop.f32.mrf.mxu0
        %v3157 = vadd.f32 %v2877, %v3156
        %v3158 = vpop.f32.mrf.mxu0
        %3159 = vmatprep.mubr.bf16.mxu0 0
        %3160 = vmatmul.mubr.bf16.gmra.mxu0 %v2849
        %v3161 = vpop.f32.mrf.mxu0
        %v3162 = vadd.f32 %v2877, %v3161
        %v3163 = vpop.f32.mrf.mxu0
        %v3164 = vpop.f32.mrf.mxu0
        %v3165 = vadd.f32 %v2877, %v3164
        %v3166 = vpop.f32.mrf.mxu0
        %3167 = vmatprep.mubr.bf16.mxu0 0
        %3168 = vmatmul.mubr.bf16.gmra.mxu0 %v2850
        %v3169 = vpop.f32.mrf.mxu0
        %v3170 = vadd.f32 %v2877, %v3169
        %v3171 = vpop.f32.mrf.mxu0
        %v3172 = vpop.f32.mrf.mxu0
        %v3173 = vadd.f32 %v2877, %v3172
        %v3174 = vpop.f32.mrf.mxu0
        %3175 = vmatprep.mubr.bf16.mxu0 0
        %3176 = vmatmul.mubr.bf16.gmra.mxu0 %v2851
        %v3177 = vpop.f32.mrf.mxu0
        %v3178 = vadd.f32 %v2877, %v3177
        %v3179 = vpop.f32.mrf.mxu0
        %v3180 = vpop.f32.mrf.mxu0
        %v3181 = vadd.f32 %v2877, %v3180
        %v3182 = vpop.f32.mrf.mxu0
        %3183 = vmatprep.mubr.bf16.mxu0 0
        %3184 = vmatmul.mubr.bf16.gmra.mxu0 %v2852
        %v3185 = vpop.f32.mrf.mxu0
        %v3186 = vadd.f32 %v2877, %v3185
        %v3187 = vpop.f32.mrf.mxu0
        %v3188 = vpop.f32.mrf.mxu0
        %v3189 = vadd.f32 %v2877, %v3188
        %v3190 = vpop.f32.mrf.mxu0
        %3191 = vmatprep.mubr.bf16.mxu0 0
        %3192 = vmatmul.mubr.bf16.gmra.mxu0 %v2853
        %v3193 = vpop.f32.mrf.mxu0
        %v3194 = vadd.f32 %v2877, %v3193
        %v3195 = vpop.f32.mrf.mxu0
        %v3196 = vpop.f32.mrf.mxu0
        %v3197 = vadd.f32 %v2877, %v3196
        %v3198 = vpop.f32.mrf.mxu0
        %3199 = vmatprep.mubr.bf16.mxu0 0
        %3200 = vmatmul.mubr.bf16.gmra.mxu0 %v2854
        %v3201 = vpop.f32.mrf.mxu0
        %v3202 = vadd.f32 %v2877, %v3201
        %v3203 = vpop.f32.mrf.mxu0
        %v3204 = vpop.f32.mrf.mxu0
        %v3205 = vadd.f32 %v2877, %v3204
        %v3206 = vpop.f32.mrf.mxu0
        %3207 = vmatprep.mubr.bf16.mxu0 0
        %3208 = vmatmul.mubr.bf16.gmra.mxu0 %v2855
        %v3209 = vpop.f32.mrf.mxu0
        %v3210 = vadd.f32 %v2877, %v3209
        %v3211 = vpop.f32.mrf.mxu0
        %v3212 = vpop.f32.mrf.mxu0
        %v3213 = vadd.f32 %v2877, %v3212
        %v3214 = vpop.f32.mrf.mxu0
        %3215 = vdwg.mxu0
        %3216 = vst [vmem:[%s272] sm:$0xff] %v2962
        %3217 = vst [vmem:[%s272 + $0x8] sm:$0xff] %v2965
        %3218 = vst [vmem:[%s272 + $0x10] sm:$0xff] %v2970
        %3219 = vst [vmem:[%s272 + $0x18] sm:$0xff] %v2973
        %3220 = vst [vmem:[%s272 + $0x20] sm:$0xff] %v2978
        %3221 = vst [vmem:[%s272 + $0x28] sm:$0xff] %v2981
        %3222 = vst [vmem:[%s272 + $0x30] sm:$0xff] %v2986
        %3223 = vst [vmem:[%s272 + $0x38] sm:$0xff] %v2989
        %3224 = vst [vmem:[%s272 + $0x40] sm:$0xff] %v2994
        %3225 = vst [vmem:[%s272 + $0x48] sm:$0xff] %v2997
        %3226 = vst [vmem:[%s272 + $0x50] sm:$0xff] %v3002
        %3227 = vst [vmem:[%s272 + $0x58] sm:$0xff] %v3005
        %3228 = vst [vmem:[%s272 + $0x60] sm:$0xff] %v3010
        %3229 = vst [vmem:[%s272 + $0x68] sm:$0xff] %v3013
        %3230 = vst [vmem:[%s272 + $0x70] sm:$0xff] %v3018
        %3231 = vst [vmem:[%s272 + $0x78] sm:$0xff] %v3021
        %3232 = vst [vmem:[%s272 + $0x80] sm:$0xff] %v3026
        %3233 = vst [vmem:[%s272 + $0x88] sm:$0xff] %v3029
        %3234 = vst [vmem:[%s272 + $0x90] sm:$0xff] %v3034
        %3235 = vst [vmem:[%s272 + $0x98] sm:$0xff] %v3037
        %3236 = vst [vmem:[%s272 + $0xa0] sm:$0xff] %v3042
        %3237 = vst [vmem:[%s272 + $0xa8] sm:$0xff] %v3045
        %3238 = vst [vmem:[%s272 + $0xb0] sm:$0xff] %v3050
        %3239 = vst [vmem:[%s272 + $0xb8] sm:$0xff] %v3053
        %3240 = vst [vmem:[%s272 + $0xc0] sm:$0xff] %v3058
        %3241 = vst [vmem:[%s272 + $0xc8] sm:$0xff] %v3061
        %3242 = vst [vmem:[%s272 + $0xd0] sm:$0xff] %v3066
        %3243 = vst [vmem:[%s272 + $0xd8] sm:$0xff] %v3069
        %3244 = vst [vmem:[%s272 + $0xe0] sm:$0xff] %v3074
        %3245 = vst [vmem:[%s272 + $0xe8] sm:$0xff] %v3077
        %3246 = vst [vmem:[%s272 + $0xf0] sm:$0xff] %v3082
        %3247 = vst [vmem:[%s272 + $0xf8] sm:$0xff] %v3085
        %3248 = vst [vmem:[%s272 + $0x100] sm:$0xff] %v3090
        %3249 = vst [vmem:[%s272 + $0x108] sm:$0xff] %v3093
        %3250 = vst [vmem:[%s272 + $0x110] sm:$0xff] %v3098
        %3251 = vst [vmem:[%s272 + $0x118] sm:$0xff] %v3101
        %3252 = vst [vmem:[%s272 + $0x120] sm:$0xff] %v3106
        %3253 = vst [vmem:[%s272 + $0x128] sm:$0xff] %v3109
        %3254 = vst [vmem:[%s272 + $0x130] sm:$0xff] %v3114
        %3255 = vst [vmem:[%s272 + $0x138] sm:$0xff] %v3117
        %3256 = vst [vmem:[%s272 + $0x140] sm:$0xff] %v3122
        %3257 = vst [vmem:[%s272 + $0x148] sm:$0xff] %v3125
        %3258 = vst [vmem:[%s272 + $0x150] sm:$0xff] %v3130
        %3259 = vst [vmem:[%s272 + $0x158] sm:$0xff] %v3133
        %3260 = vst [vmem:[%s272 + $0x160] sm:$0xff] %v3138
        %3261 = vst [vmem:[%s272 + $0x168] sm:$0xff] %v3141
        %3262 = vst [vmem:[%s272 + $0x170] sm:$0xff] %v3146
        %3263 = vst [vmem:[%s272 + $0x178] sm:$0xff] %v3149
        %3264 = vst [vmem:[%s272 + $0x180] sm:$0xff] %v3154
        %3265 = vst [vmem:[%s272 + $0x188] sm:$0xff] %v3157
        %3266 = vst [vmem:[%s272 + $0x190] sm:$0xff] %v3162
        %3267 = vst [vmem:[%s272 + $0x198] sm:$0xff] %v3165
        %3268 = vst [vmem:[%s272 + $0x1a0] sm:$0xff] %v3170
        %3269 = vst [vmem:[%s272 + $0x1a8] sm:$0xff] %v3173
        %3270 = vst [vmem:[%s272 + $0x1b0] sm:$0xff] %v3178
        %3271 = vst [vmem:[%s272 + $0x1b8] sm:$0xff] %v3181
        %3272 = vst [vmem:[%s272 + $0x1c0] sm:$0xff] %v3186
        %3273 = vst [vmem:[%s272 + $0x1c8] sm:$0xff] %v3189
        %3274 = vst [vmem:[%s272 + $0x1d0] sm:$0xff] %v3194
        %3275 = vst [vmem:[%s272 + $0x1d8] sm:$0xff] %v3197
        %3276 = vst [vmem:[%s272 + $0x1e0] sm:$0xff] %v3202
        %3277 = vst [vmem:[%s272 + $0x1e8] sm:$0xff] %v3205
        %3278 = vst [vmem:[%s272 + $0x1f0] sm:$0xff] %v3210
        %3279 = vst [vmem:[%s272 + $0x1f8] sm:$0xff] %v3213
        %s3280 = sand.u32 %s181, 1
        %s3281 = scalar_lea.sflag [#allocation3], %s3280
        %s3282 = sand.u32 %s181, 1
        %s3283 = smul.addr %s3282, 512
        %s3284 = scalar_lea.vmem [#allocation2], %s3283
        // Predicated region
        $region49: #{tpu_custom_call.1} parent=47 // pred_check
          %p3285 = pneg %p191
        $region50: #{tpu_custom_call.1} parent=47 // pred_check_branch
          %3287 = sbr.rel (%p3285) target = $region52
        $region51: #{tpu_custom_call.1} parent=47 // pred_region
          %s3288 = smul.u32 64, %s21
          %s3290 = ssub.s32 8192, 8192
          %3291 = vsyncadd %s3281, %s3290
          %s3292 = smul.addr %s3288, 128
          %s3293 = scalar_lea.hbm %s7, %s3292
          %s3294 = sshll.u32 %s3284, 4
          %s3295 = int_to_ptr.vmem [resolvable:$true] %s3294
          %3300 = dma.vmem_to_hbm [thread:$0]  %s3295, 8192, %s3293, %s3281, 128, 128, 8
        $region52: #{tpu_custom_call.1} parent=47 // pred_fallthru
          _
      $region48: #{tpu_custom_call.1} parent=5 // pred_fallthru
        _
      %p3301 = scmp.le.s32.totalorder 2, %s16
      // Predicated region
      $region53: #{tpu_custom_call.1} parent=5 // pred_check
        %p3302 = pneg %p3301
      $region54: #{tpu_custom_call.1} parent=5 // pred_check_branch
        %3304 = sbr.rel (%p3302) target = $region56
      $region55: #{tpu_custom_call.1} parent=5 // pred_region
        %s3305 = ssub.s32 %s16, 2
        // Predicated region
        $region57: #{tpu_custom_call.1} parent=55 // pred_check
          %p3306 = pneg %p197
        $region58: #{tpu_custom_call.1} parent=55 // pred_check_branch
          %3308 = sbr.rel (%p3306) target = $region60
        $region59: #{tpu_custom_call.1} parent=55 // pred_region
          %s3309 = sand.u32 %s182, 1
          %s3310 = scalar_lea.sflag [#allocation3], %s3309
          %s3311 = sand.u32 %s182, 1
          %s3312 = smul.addr %s3311, 512
          %s3313 = scalar_lea.vmem [#allocation2], %s3312
          %3314 = dma.done %s3310, 8192
        $region60: #{tpu_custom_call.1} parent=55 // pred_fallthru
          _
      $region56: #{tpu_custom_call.1} parent=5 // pred_fallthru
        _
    $region6: #{tpu_custom_call.1} parent=1 // loop_footer
      %s20 = sadd.s32 1, %s16
    $region7: #{tpu_custom_call.1} parent=1 // loop_footer_branch
      %15 = sbr.rel target = $region3
    $region8: #{tpu_custom_call.1} parent=1 // loop_exit
      _
    %3315 = vsyncpa [#allocation3], 1
    %s3316 = scalar_lea.sflag [#allocation3], 1
    %3317 = vsyncpa %s3316, 1

</llo_original>
